<compile_context>
chip_gen: v7x
topology: tpu7x:2x2x1
jax: 0.10.0
libtpu: 0.0.40
codegen_flags: <defaults>
</compile_context>

<pallas_src>
import jax
import jax.numpy as jnp
from jax.experimental import pallas as pl
from jax.experimental.pallas import tpu as pltpu

K_DEFAULT = 128    # number of gaussian kernels (module default)
LANES = 128        # lane width used to pack x

_PI = 3.14159                      # matches the torch.jit.script constant exactly
_A = (2.0 * _PI) ** 0.5
_INV_A = 1.0 / _A


def _bf16_eup_ok():
    """bf16 EUP/VPU exists on v6e / v7x; not on v5e and older generations."""
    try:
        kind = jax.devices()[0].device_kind.lower()
    except Exception:
        return False
    return ("v6" in kind) or ("v7" in kind) or ("7x" in kind)


def _make_gaussian_kernel(tile_rows, bf16_math):
    """Kernel for one grid step: x block (tile_rows,128) -> out block (tile_rows*128, K)."""

    def kernel(x_ref, mean_ref, nhiv_ref, coef_ref, o_ref):
        mean = mean_ref[...]                       # (1, K) f32
        nhiv = nhiv_ref[...]                       # (1, K) f32, == -0.5 / std^2
        coef = coef_ref[...]                       # (1, K) f32, == 1 / (sqrt(2*pi)*std)
        if bf16_math:
            coef = coef.astype(jnp.bfloat16)       # hoisted, once per tile

        # Single lane->sublane relayout of the whole x tile (one small XLU
        # transpose per grid step instead of one 128x128 transpose per row).
        xt = x_ref[...].T                          # (128, tile_rows) f32

        # Statically unrolled sub-block loop (static lane slices; see header).
        for r in range(tile_rows):
            col = xt[:, r:r + 1]                   # (128, 1) f32
            d = col - mean                         # (128, K) f32
            arg = d * d * nhiv                     # (128, K) f32  (negation folded)
            if bf16_math:
                res = jnp.exp(arg.astype(jnp.bfloat16)) * coef   # bf16 EUP path
            else:
                res = jnp.exp(arg) * coef
            o_ref[r * LANES:(r + 1) * LANES, :] = res.astype(o_ref.dtype)

    return kernel


def gaussian_layer(x, means_weight, stds_weight):
    """Pallas implementation of GaussianLayer.forward.

    Args:
      x:            any-shape array (flattened like x.view(-1, 1)).
      means_weight: (1, K) embedding weight.
      stds_weight:  (1, K) embedding weight.
    Returns:
      (N, K) array, N = x.size, dtype of means_weight.
    """
    out_dtype = means_weight.dtype
    k = means_weight.shape[-1]
    out_bytes = jnp.dtype(out_dtype).itemsize

    # ---- (1,K) parameter prep hoisted out of the kernel ----------------------
    mean = means_weight.astype(jnp.float32).reshape(1, k)
    std = jnp.abs(stds_weight.astype(jnp.float32).reshape(1, k)) + 0.01
    inv_std = 1.0 / std
    nhiv = -0.5 * inv_std * inv_std            # -0.5 folded into the scale
    coef = inv_std * _INV_A                    # 1 / (sqrt(2*pi) * std)

    # ---- pack x lane-dense: (R, 128) f32 -------------------------------------
    x_flat = x.reshape(-1).astype(jnp.float32)
    n = x_flat.shape[0]
    r_rows = pl.cdiv(max(n, 1), LANES)

    # ---- tile selection -------------------------------------------------------
    # Output block = tile_rows*128 rows x K.  Large inputs get 2 MiB (f32)
    # blocks to amortize per-grid-step overhead against fast HBM (v7x); the
    # grid keeps >= 2 steps whenever r_rows >= 9 (megacore sharding).
    if r_rows >= 256:
        tile_rows = 32          # 4096-row / 2 MiB f32 blocks, grid >= 8
    elif r_rows >= 64:
        tile_rows = 16          # 2048-row / 1 MiB f32 blocks, grid >= 4
    elif r_rows >= 8:
        tile_rows = 8           # 1024-row blocks
    else:
        tile_rows = max(r_rows, 1)   # tiny input (N < 1024): single grid step
    tile_n = tile_rows * LANES

    grid_steps = pl.cdiv(max(n, 1), tile_n)

    # Pad x rows so every INPUT block is in bounds (cheap: < tile_rows rows).
    r_pad = grid_steps * tile_rows
    if r_pad * LANES != n:
        x_flat = jnp.pad(x_flat, (0, r_pad * LANES - n))
    x_packed = x_flat.reshape(r_pad, LANES)

    # Big outputs keep out_shape == (n, K) (ragged tail masked on writeback);
    # only the tiny single-block case pads + slices (< 0.5 MiB).
    out_rows = max(n, tile_n)

    bf16_math = (out_dtype == jnp.bfloat16) and _bf16_eup_ok()
    kernel = _make_gaussian_kernel(tile_rows, bf16_math)

    out = pl.pallas_call(
        kernel,
        out_shape=jax.ShapeDtypeStruct((out_rows, k), out_dtype),
        grid_spec=pltpu.PrefetchScalarGridSpec(
            num_scalar_prefetch=0,
            grid=(grid_steps,),
            in_specs=[
                pl.BlockSpec((tile_rows, LANES), lambda i: (i, 0)),
                pl.BlockSpec((1, k), lambda i: (0, 0)),
                pl.BlockSpec((1, k), lambda i: (0, 0)),
                pl.BlockSpec((1, k), lambda i: (0, 0)),
            ],
            out_specs=pl.BlockSpec((tile_n, k), lambda i: (i, 0)),
        ),
        compiler_params=pltpu.CompilerParams(
            dimension_semantics=("parallel",),
            vmem_limit_bytes=32 * 1024 * 1024),
        cost_estimate=pl.CostEstimate(
            flops=4 * n * k,
            transcendentals=n * k,
            bytes_accessed=n * k * out_bytes + 4 * n + 12 * k),
    )(x_packed, mean, nhiv, coef)

    if out_rows != n:
        out = out[:n]
    return out


def gaussian_ref(x, means_weight, stds_weight):
    """Pure-JAX reference mirroring the PyTorch forward exactly."""
    xc = x.reshape(-1, 1).astype(jnp.float32)
    mean = means_weight.astype(jnp.float32)
    std = jnp.abs(stds_weight.astype(jnp.float32)) + 0.01
    out = jnp.exp(-0.5 * ((xc - mean) / std) ** 2) / (_A * std)
    return out.astype(means_weight.dtype)


if __name__ == "__main__":
    key = jax.random.PRNGKey(0)
    k_x, k_m, k_s = jax.random.split(key, 3)

    K = K_DEFAULT
    # Parameters: nn.Embedding(1, K) weights, init uniform(0, 3).
    means_weight = jax.random.uniform(k_m, (1, K), minval=0.0, maxval=3.0,
                                      dtype=jnp.float32)
    stds_weight = jax.random.uniform(k_s, (1, K), minval=0.0, maxval=3.0,
                                     dtype=jnp.float32)

    # Case 1: N divides the tile evenly (a small batch of pairwise-distance maps).
    x1 = jax.random.normal(k_x, (2, 4, 16, 16), dtype=jnp.float32) * 2.0
    out1 = jax.block_until_ready(gaussian_layer(x1, means_weight, stds_weight))
    ref1 = gaussian_ref(x1, means_weight, stds_weight)
    assert out1.shape == (x1.size, K), out1.shape
    assert out1.dtype == means_weight.dtype
    assert jnp.allclose(out1, ref1, atol=1e-5, rtol=1e-5), \
        float(jnp.max(jnp.abs(out1 - ref1)))

    # Case 2: ragged N (masked last output block, multi-step grid).
    x2 = jax.random.normal(jax.random.PRNGKey(1), (1, 35, 35),
                           dtype=jnp.float32) * 2.0
    out2 = jax.block_until_ready(gaussian_layer(x2, means_weight, stds_weight))
    ref2 = gaussian_ref(x2, means_weight, stds_weight)
    assert out2.shape == (x2.size, K), out2.shape
    assert jnp.allclose(out2, ref2, atol=1e-5, rtol=1e-5), \
        float(jnp.max(jnp.abs(out2 - ref2)))

    # Case 3: bf16 weights -> output written directly in bf16 from the kernel
    # (and bf16 exp/coef-mul on chips with a bf16 EUP: v6e/v7x; f32 on v5e).
    mw16 = means_weight.astype(jnp.bfloat16)
    sw16 = stds_weight.astype(jnp.bfloat16)
    out3 = jax.block_until_ready(gaussian_layer(x1, mw16, sw16))
    ref3 = gaussian_ref(x1, mw16, sw16)
    assert out3.shape == (x1.size, K), out3.shape
    assert out3.dtype == jnp.bfloat16
    assert jnp.allclose(out3.astype(jnp.float32), ref3.astype(jnp.float32),
                        atol=5e-2, rtol=5e-2), \
        float(jnp.max(jnp.abs(out3.astype(jnp.float32) - ref3.astype(jnp.float32))))

    print("KERNEL_OK")
</pallas_src>

<mosaic_0001>
module attributes {stable_mosaic.version = 11 : i64} {
  func.func @kernel(%arg0: i32, %arg1: memref<8x128xf32, #tpu.memory_space<vmem>>, %arg2: memref<1x128xf32, #tpu.memory_space<vmem>>, %arg3: memref<1x128xf32, #tpu.memory_space<vmem>>, %arg4: memref<1x128xf32, #tpu.memory_space<vmem>>, %arg5: memref<1024x128xf32, #tpu.memory_space<vmem>>) attributes {dimension_semantics = [#tpu.dimension_semantics<parallel>], iteration_bounds = array<i64: 2>, scalar_prefetch = 0 : i64, scratch_operands = 0 : i64, tpu.core_type = #tpu.core_type<tc>, window_params = [{transform_indices = @transform_0, window_bounds = array<i64: 8, 128>}, {pipeline_mode = #tpu.pipeline_mode<synchronous>, transform_indices = @transform_1, window_bounds = array<i64: 1, 128>}, {pipeline_mode = #tpu.pipeline_mode<synchronous>, transform_indices = @transform_2, window_bounds = array<i64: 1, 128>}, {pipeline_mode = #tpu.pipeline_mode<synchronous>, transform_indices = @transform_3, window_bounds = array<i64: 1, 128>}, {transform_indices = @transform_4, window_bounds = array<i64: 1024, 128>}]} {
    %c0 = arith.constant 0 : index
    %c0_0 = arith.constant 0 : index
    %0 = vector.load %arg2[%c0, %c0_0] : memref<1x128xf32, #tpu.memory_space<vmem>>, vector<1x128xf32>
    %c0_1 = arith.constant 0 : index
    %c0_2 = arith.constant 0 : index
    %1 = vector.load %arg3[%c0_1, %c0_2] : memref<1x128xf32, #tpu.memory_space<vmem>>, vector<1x128xf32>
    %c0_3 = arith.constant 0 : index
    %c0_4 = arith.constant 0 : index
    %2 = vector.load %arg4[%c0_3, %c0_4] : memref<1x128xf32, #tpu.memory_space<vmem>>, vector<1x128xf32>
    %c0_5 = arith.constant 0 : index
    %c0_6 = arith.constant 0 : index
    %3 = vector.load %arg1[%c0_5, %c0_6] : memref<8x128xf32, #tpu.memory_space<vmem>>, vector<8x128xf32>
    %4 = tpu.transpose %3, [1, 0] : vector<8x128xf32> -> vector<128x8xf32>
    %5 = vector.extract_strided_slice %4 {offsets = [0, 0], sizes = [128, 1], strides = [1, 1]} : vector<128x8xf32> to vector<128x1xf32>
    %6 = vector.broadcast %5 : vector<128x1xf32> to vector<128x128xf32>
    %7 = vector.broadcast %0 : vector<1x128xf32> to vector<128x128xf32>
    %8 = arith.subf %6, %7 : vector<128x128xf32>
    %9 = arith.mulf %8, %8 : vector<128x128xf32>
    %10 = vector.broadcast %1 : vector<1x128xf32> to vector<128x128xf32>
    %11 = arith.mulf %9, %10 : vector<128x128xf32>
    %12 = math.exp %11 : vector<128x128xf32>
    %13 = vector.broadcast %2 : vector<1x128xf32> to vector<128x128xf32>
    %14 = arith.mulf %12, %13 : vector<128x128xf32>
    %c0_7 = arith.constant 0 : index
    %c0_8 = arith.constant 0 : index
    %15 = vector.load %arg5[%c0_7, %c0_8] : memref<1024x128xf32, #tpu.memory_space<vmem>>, vector<128x128xf32>
    tpu.vector_store %arg5[%c0_7, %c0_8], %14 {strides = array<i32>} : memref<1024x128xf32, #tpu.memory_space<vmem>>, vector<128x128xf32>,
    %16 = vector.extract_strided_slice %4 {offsets = [0, 1], sizes = [128, 1], strides = [1, 1]} : vector<128x8xf32> to vector<128x1xf32>
    %17 = vector.broadcast %16 : vector<128x1xf32> to vector<128x128xf32>
    %18 = vector.broadcast %0 : vector<1x128xf32> to vector<128x128xf32>
    %19 = arith.subf %17, %18 : vector<128x128xf32>
    %20 = arith.mulf %19, %19 : vector<128x128xf32>
    %21 = vector.broadcast %1 : vector<1x128xf32> to vector<128x128xf32>
    %22 = arith.mulf %20, %21 : vector<128x128xf32>
    %23 = math.exp %22 : vector<128x128xf32>
    %24 = vector.broadcast %2 : vector<1x128xf32> to vector<128x128xf32>
    %25 = arith.mulf %23, %24 : vector<128x128xf32>
    %c128 = arith.constant 128 : index
    %c0_9 = arith.constant 0 : index
    %26 = vector.load %arg5[%c128, %c0_9] : memref<1024x128xf32, #tpu.memory_space<vmem>>, vector<128x128xf32>
    tpu.vector_store %arg5[%c128, %c0_9], %25 {strides = array<i32>} : memref<1024x128xf32, #tpu.memory_space<vmem>>, vector<128x128xf32>,
    %27 = vector.extract_strided_slice %4 {offsets = [0, 2], sizes = [128, 1], strides = [1, 1]} : vector<128x8xf32> to vector<128x1xf32>
    %28 = vector.broadcast %27 : vector<128x1xf32> to vector<128x128xf32>
    %29 = vector.broadcast %0 : vector<1x128xf32> to vector<128x128xf32>
    %30 = arith.subf %28, %29 : vector<128x128xf32>
    %31 = arith.mulf %30, %30 : vector<128x128xf32>
    %32 = vector.broadcast %1 : vector<1x128xf32> to vector<128x128xf32>
    %33 = arith.mulf %31, %32 : vector<128x128xf32>
    %34 = math.exp %33 : vector<128x128xf32>
    %35 = vector.broadcast %2 : vector<1x128xf32> to vector<128x128xf32>
    %36 = arith.mulf %34, %35 : vector<128x128xf32>
    %c256 = arith.constant 256 : index
    %c0_10 = arith.constant 0 : index
    %37 = vector.load %arg5[%c256, %c0_10] : memref<1024x128xf32, #tpu.memory_space<vmem>>, vector<128x128xf32>
    tpu.vector_store %arg5[%c256, %c0_10], %36 {strides = array<i32>} : memref<1024x128xf32, #tpu.memory_space<vmem>>, vector<128x128xf32>,
    %38 = vector.extract_strided_slice %4 {offsets = [0, 3], sizes = [128, 1], strides = [1, 1]} : vector<128x8xf32> to vector<128x1xf32>
    %39 = vector.broadcast %38 : vector<128x1xf32> to vector<128x128xf32>
    %40 = vector.broadcast %0 : vector<1x128xf32> to vector<128x128xf32>
    %41 = arith.subf %39, %40 : vector<128x128xf32>
    %42 = arith.mulf %41, %41 : vector<128x128xf32>
    %43 = vector.broadcast %1 : vector<1x128xf32> to vector<128x128xf32>
    %44 = arith.mulf %42, %43 : vector<128x128xf32>
    %45 = math.exp %44 : vector<128x128xf32>
    %46 = vector.broadcast %2 : vector<1x128xf32> to vector<128x128xf32>
    %47 = arith.mulf %45, %46 : vector<128x128xf32>
    %c384 = arith.constant 384 : index
    %c0_11 = arith.constant 0 : index
    %48 = vector.load %arg5[%c384, %c0_11] : memref<1024x128xf32, #tpu.memory_space<vmem>>, vector<128x128xf32>
    tpu.vector_store %arg5[%c384, %c0_11], %47 {strides = array<i32>} : memref<1024x128xf32, #tpu.memory_space<vmem>>, vector<128x128xf32>,
    %49 = vector.extract_strided_slice %4 {offsets = [0, 4], sizes = [128, 1], strides = [1, 1]} : vector<128x8xf32> to vector<128x1xf32>
    %50 = vector.broadcast %49 : vector<128x1xf32> to vector<128x128xf32>
    %51 = vector.broadcast %0 : vector<1x128xf32> to vector<128x128xf32>
    %52 = arith.subf %50, %51 : vector<128x128xf32>
    %53 = arith.mulf %52, %52 : vector<128x128xf32>
    %54 = vector.broadcast %1 : vector<1x128xf32> to vector<128x128xf32>
    %55 = arith.mulf %53, %54 : vector<128x128xf32>
    %56 = math.exp %55 : vector<128x128xf32>
    %57 = vector.broadcast %2 : vector<1x128xf32> to vector<128x128xf32>
    %58 = arith.mulf %56, %57 : vector<128x128xf32>
    %c512 = arith.constant 512 : index
    %c0_12 = arith.constant 0 : index
    %59 = vector.load %arg5[%c512, %c0_12] : memref<1024x128xf32, #tpu.memory_space<vmem>>, vector<128x128xf32>
    tpu.vector_store %arg5[%c512, %c0_12], %58 {strides = array<i32>} : memref<1024x128xf32, #tpu.memory_space<vmem>>, vector<128x128xf32>,
    %60 = vector.extract_strided_slice %4 {offsets = [0, 5], sizes = [128, 1], strides = [1, 1]} : vector<128x8xf32> to vector<128x1xf32>
    %61 = vector.broadcast %60 : vector<128x1xf32> to vector<128x128xf32>
    %62 = vector.broadcast %0 : vector<1x128xf32> to vector<128x128xf32>
    %63 = arith.subf %61, %62 : vector<128x128xf32>
    %64 = arith.mulf %63, %63 : vector<128x128xf32>
    %65 = vector.broadcast %1 : vector<1x128xf32> to vector<128x128xf32>
    %66 = arith.mulf %64, %65 : vector<128x128xf32>
    %67 = math.exp %66 : vector<128x128xf32>
    %68 = vector.broadcast %2 : vector<1x128xf32> to vector<128x128xf32>
    %69 = arith.mulf %67, %68 : vector<128x128xf32>
    %c640 = arith.constant 640 : index
    %c0_13 = arith.constant 0 : index
    %70 = vector.load %arg5[%c640, %c0_13] : memref<1024x128xf32, #tpu.memory_space<vmem>>, vector<128x128xf32>
    tpu.vector_store %arg5[%c640, %c0_13], %69 {strides = array<i32>} : memref<1024x128xf32, #tpu.memory_space<vmem>>, vector<128x128xf32>,
    %71 = vector.extract_strided_slice %4 {offsets = [0, 6], sizes = [128, 1], strides = [1, 1]} : vector<128x8xf32> to vector<128x1xf32>
    %72 = vector.broadcast %71 : vector<128x1xf32> to vector<128x128xf32>
    %73 = vector.broadcast %0 : vector<1x128xf32> to vector<128x128xf32>
    %74 = arith.subf %72, %73 : vector<128x128xf32>
    %75 = arith.mulf %74, %74 : vector<128x128xf32>
    %76 = vector.broadcast %1 : vector<1x128xf32> to vector<128x128xf32>
    %77 = arith.mulf %75, %76 : vector<128x128xf32>
    %78 = math.exp %77 : vector<128x128xf32>
    %79 = vector.broadcast %2 : vector<1x128xf32> to vector<128x128xf32>
    %80 = arith.mulf %78, %79 : vector<128x128xf32>
    %c768 = arith.constant 768 : index
    %c0_14 = arith.constant 0 : index
    %81 = vector.load %arg5[%c768, %c0_14] : memref<1024x128xf32, #tpu.memory_space<vmem>>, vector<128x128xf32>
    tpu.vector_store %arg5[%c768, %c0_14], %80 {strides = array<i32>} : memref<1024x128xf32, #tpu.memory_space<vmem>>, vector<128x128xf32>,
    %82 = vector.extract_strided_slice %4 {offsets = [0, 7], sizes = [128, 1], strides = [1, 1]} : vector<128x8xf32> to vector<128x1xf32>
    %83 = vector.broadcast %82 : vector<128x1xf32> to vector<128x128xf32>
    %84 = vector.broadcast %0 : vector<1x128xf32> to vector<128x128xf32>
    %85 = arith.subf %83, %84 : vector<128x128xf32>
    %86 = arith.mulf %85, %85 : vector<128x128xf32>
    %87 = vector.broadcast %1 : vector<1x128xf32> to vector<128x128xf32>
    %88 = arith.mulf %86, %87 : vector<128x128xf32>
    %89 = math.exp %88 : vector<128x128xf32>
    %90 = vector.broadcast %2 : vector<1x128xf32> to vector<128x128xf32>
    %91 = arith.mulf %89, %90 : vector<128x128xf32>
    %c896 = arith.constant 896 : index
    %c0_15 = arith.constant 0 : index
    %92 = vector.load %arg5[%c896, %c0_15] : memref<1024x128xf32, #tpu.memory_space<vmem>>, vector<128x128xf32>
    tpu.vector_store %arg5[%c896, %c0_15], %91 {strides = array<i32>} : memref<1024x128xf32, #tpu.memory_space<vmem>>, vector<128x128xf32>,
    return
  }
  func.func @transform_0(%arg0: i32) -> (i32, i32) {
    %c0_i32 = arith.constant 0 : i32
    %c0_i32_0 = arith.constant 0 : i32
    return %arg0, %c0_i32 : i32, i32
  }
  func.func @transform_1(%arg0: i32) -> (i32, i32) {
    %c0_i32 = arith.constant 0 : i32
    %c0_i32_0 = arith.constant 0 : i32
    %c0_i32_1 = arith.constant 0 : i32
    return %c0_i32, %c0_i32_0 : i32, i32
  }
  func.func @transform_2(%arg0: i32) -> (i32, i32) {
    %c0_i32 = arith.constant 0 : i32
    %c0_i32_0 = arith.constant 0 : i32
    %c0_i32_1 = arith.constant 0 : i32
    return %c0_i32, %c0_i32_0 : i32, i32
  }
  func.func @transform_3(%arg0: i32) -> (i32, i32) {
    %c0_i32 = arith.constant 0 : i32
    %c0_i32_0 = arith.constant 0 : i32
    %c0_i32_1 = arith.constant 0 : i32
    return %c0_i32, %c0_i32_0 : i32, i32
  }
  func.func @transform_4(%arg0: i32) -> (i32, i32) {
    %c0_i32 = arith.constant 0 : i32
    %c0_i32_0 = arith.constant 0 : i32
    return %arg0, %c0_i32 : i32, i32
  }
}

</mosaic_0001>

<llo_original>
// kernel: tpu_custom_call.1
$region0: #{tpu_custom_call.1}
  #allocation0 [shape = 'u32[]', space=smem, size = 0x4, offset = 0x4, fixed_abs, tag = 'smem constant byte address 0x4 - core index']
  #allocation1 [shape = 'u32[144,128]{1,0:T(1,128)}', space=vmem, size = 0x12000, scoped, tag = 'internal scratch']
  %s0 = inlined_call_operand.hbm [shape: f32[16,128], index: 0, kind: input, shape index: {}]
  %s1 = inlined_call_operand.vmem [shape: f32[1,128], index: 1, kind: input, shape index: {}]
  %s2 = inlined_call_operand.vmem [shape: f32[1,128], index: 2, kind: input, shape index: {}]
  %s3 = inlined_call_operand.vmem [shape: f32[1,128], index: 3, kind: input, shape index: {}]
  %s4 = inlined_call_operand.hbm [shape: f32[2048,128], index: 4, kind: output, shape index: {}]
  %s5 = sld [smem:[#allocation0]]
  $region53: #{tpu_custom_call.1} parent=0
    _
  %s7 = ssub.s32 1, %s5
  %s8 = scalar_select 0, %s7, %s5
  $region1: #{tpu_custom_call.1} parent=0
    #allocation2 [shape = 'u8[8192]{0}', space=vmem, size = 0x2000, scoped, tag = 'input window, operand 0']
    #allocation3 [shape = 's32[2]{0}', space=sflag, size = 0x8, scoped, tag = 'scoped memory for tpu_custom_call.1']
    #allocation4 [shape = 's32[2]{0}', space=sflag, size = 0x8, scoped, tag = 'scoped memory for tpu_custom_call.1']
    #allocation5 [shape = 'u8[1048576]{0}', space=vmem, size = 0x100000, scoped, tag = 'output window, operand 0']
    %9 = vsyncpa [#allocation3], 0
    %s10 = scalar_lea.sflag [#allocation3], 1
    %11 = vsyncpa %s10, 0
    %12 = vsyncpa [#allocation4], 0
    %s13 = scalar_lea.sflag [#allocation4], 1
    %14 = vsyncpa %s13, 0
    loop: start=0, step=1, limit=4
    $region2: #{tpu_custom_call.1} parent=1 // loop_pre_header
      _
    $region3: #{tpu_custom_call.1} parent=1 // loop_header
      %s16 = sphi 0, %s20
      %p17 = scmp.ge.s32.totalorder %s16, 4
      %s26 = sphi 0, %s28
      %s29 = sphi 0, %s26
      %s30 = sphi 0, %s29
      %s46 = sphi 0, %s30
      %s50 = sphi 0, %s50
      %s52 = sphi 0, %s50
      %s53 = sphi 0, %s52
      %s67 = sphi 0, %s53
      %s71 = sphi 0, %s71
      %s73 = sphi 0, %s71
      %s74 = sphi 0, %s73
      %s88 = sphi 0, %s74
      %s92 = sphi 0, %s92
      %s94 = sphi 0, %s92
      %s95 = sphi 0, %s94
      %s109 = sphi 0, %s95
      %s115 = sphi 0, %s117
      %s118 = sphi 0, %s115
      %s119 = sphi 0, %s118
      %s135 = sphi 0, %s119
    $region4: #{tpu_custom_call.1} parent=1 // loop_header_branch
      %19 = sbr.rel (%p17) target = $region8
    $region5: #{tpu_custom_call.1} parent=1 // loop_body
      %s21 = ssub.s32 %s16, 1
      %s22 = ssub.s32 %s16, 2
      %s23 = sadd.s32 %s16, 1
      %s24 = ssub.s32 %s16, %s23
      %p25 = scmp.eq.s32.totalorder %s24, 0
      %s27 = sadd.s32 %s26, 1
      %s28 = scalar_select %p25, %s26, %s27
      %p31 = pneg %p25
      %p32 = scmp.eq.s32.totalorder %s16, 1
      %p33 = por %p31, %p32
      %p34 = scmp.ne.s32.totalorder %s26, %s29
      %p35 = scmp.eq.s32.totalorder %s16, 0
      %p36 = por %p34, %p35
      %p37 = scmp.ne.s32.totalorder %s26, %s29
      %p38 = scmp.eq.s32.totalorder %s21, 1
      %p39 = por %p37, %p38
      %p40 = scmp.ne.s32.totalorder %s29, %s30
      %p41 = scmp.eq.s32.totalorder %s21, 0
      %p42 = por %p40, %p41
      %p43 = scmp.ne.s32.totalorder %s29, %s30
      %p44 = scmp.eq.s32.totalorder %s22, 1
      %p45 = por %p43, %p44
      %p47 = scmp.ne.s32.totalorder %s30, %s46
      %p48 = scmp.eq.s32.totalorder %s22, 0
      %p49 = por %p47, %p48
      %s51 = sadd.s32 %s50, 1
      %p54 = scmp.eq.s32.totalorder %s16, 1
      %p55 = scmp.ne.s32.totalorder %s50, %s52
      %p56 = scmp.eq.s32.totalorder %s16, 0
      %p57 = por %p55, %p56
      %p58 = scmp.ne.s32.totalorder %s50, %s52
      %p59 = scmp.eq.s32.totalorder %s21, 1
      %p60 = por %p58, %p59
      %p61 = scmp.ne.s32.totalorder %s52, %s53
      %p62 = scmp.eq.s32.totalorder %s21, 0
      %p63 = por %p61, %p62
      %p64 = scmp.ne.s32.totalorder %s52, %s53
      %p65 = scmp.eq.s32.totalorder %s22, 1
      %p66 = por %p64, %p65
      %p68 = scmp.ne.s32.totalorder %s53, %s67
      %p69 = scmp.eq.s32.totalorder %s22, 0
      %p70 = por %p68, %p69
      %s72 = sadd.s32 %s71, 1
      %p75 = scmp.eq.s32.totalorder %s16, 1
      %p76 = scmp.ne.s32.totalorder %s71, %s73
      %p77 = scmp.eq.s32.totalorder %s16, 0
      %p78 = por %p76, %p77
      %p79 = scmp.ne.s32.totalorder %s71, %s73
      %p80 = scmp.eq.s32.totalorder %s21, 1
      %p81 = por %p79, %p80
      %p82 = scmp.ne.s32.totalorder %s73, %s74
      %p83 = scmp.eq.s32.totalorder %s21, 0
      %p84 = por %p82, %p83
      %p85 = scmp.ne.s32.totalorder %s73, %s74
      %p86 = scmp.eq.s32.totalorder %s22, 1
      %p87 = por %p85, %p86
      %p89 = scmp.ne.s32.totalorder %s74, %s88
      %p90 = scmp.eq.s32.totalorder %s22, 0
      %p91 = por %p89, %p90
      %s93 = sadd.s32 %s92, 1
      %p96 = scmp.eq.s32.totalorder %s16, 1
      %p97 = scmp.ne.s32.totalorder %s92, %s94
      %p98 = scmp.eq.s32.totalorder %s16, 0
      %p99 = por %p97, %p98
      %p100 = scmp.ne.s32.totalorder %s92, %s94
      %p101 = scmp.eq.s32.totalorder %s21, 1
      %p102 = por %p100, %p101
      %p103 = scmp.ne.s32.totalorder %s94, %s95
      %p104 = scmp.eq.s32.totalorder %s21, 0
      %p105 = por %p103, %p104
      %p106 = scmp.ne.s32.totalorder %s94, %s95
      %p107 = scmp.eq.s32.totalorder %s22, 1
      %p108 = por %p106, %p107
      %p110 = scmp.ne.s32.totalorder %s95, %s109
      %p111 = scmp.eq.s32.totalorder %s22, 0
      %p112 = por %p110, %p111
      %s113 = ssub.s32 %s16, %s23
      %p114 = scmp.eq.s32.totalorder %s113, 0
      %s116 = sadd.s32 %s115, 1
      %s117 = scalar_select %p114, %s115, %s116
      %p120 = pneg %p114
      %p121 = scmp.eq.s32.totalorder %s16, 1
      %p122 = por %p120, %p121
      %p123 = scmp.ne.s32.totalorder %s115, %s118
      %p124 = scmp.eq.s32.totalorder %s16, 0
      %p125 = por %p123, %p124
      %p126 = scmp.ne.s32.totalorder %s115, %s118
      %p127 = scmp.eq.s32.totalorder %s21, 1
      %p128 = por %p126, %p127
      %p129 = scmp.ne.s32.totalorder %s118, %s119
      %p130 = scmp.eq.s32.totalorder %s21, 0
      %p131 = por %p129, %p130
      %p132 = scmp.ne.s32.totalorder %s118, %s119
      %p133 = scmp.eq.s32.totalorder %s22, 1
      %p134 = por %p132, %p133
      %p136 = scmp.ne.s32.totalorder %s119, %s135
      %p137 = scmp.eq.s32.totalorder %s22, 0
      %p138 = por %p136, %p137
      %p139 = scmp.le.s32.totalorder 1, %s16
      %p140 = scmp.lt.s32.totalorder %s16, 3
      %p141 = pnand %p139, %p140
      %p142 = pneg %p141
      // Predicated region
      $region9: #{tpu_custom_call.1} parent=5 // pred_check
        _
      $region10: #{tpu_custom_call.1} parent=5 // pred_check_branch
        %144 = sbr.rel (%p141) target = $region12
      $region11: #{tpu_custom_call.1} parent=5 // pred_region
        %s145 = ssub.s32 %s16, 1
        // Predicated region
        $region13: #{tpu_custom_call.1} parent=11 // pred_check
          %p146 = pneg %p63
        $region14: #{tpu_custom_call.1} parent=11 // pred_check_branch
          %148 = sbr.rel (%p146) target = $region16
        $region15: #{tpu_custom_call.1} parent=11 // pred_region
          _
        $region16: #{tpu_custom_call.1} parent=11 // pred_fallthru
          _
        // Predicated region
        $region17: #{tpu_custom_call.1} parent=11 // pred_check
          %p149 = pneg %p84
        $region18: #{tpu_custom_call.1} parent=11 // pred_check_branch
          %151 = sbr.rel (%p149) target = $region20
        $region19: #{tpu_custom_call.1} parent=11 // pred_region
          _
        $region20: #{tpu_custom_call.1} parent=11 // pred_fallthru
          _
        // Predicated region
        $region21: #{tpu_custom_call.1} parent=11 // pred_check
          %p152 = pneg %p105
        $region22: #{tpu_custom_call.1} parent=11 // pred_check_branch
          %154 = sbr.rel (%p152) target = $region24
        $region23: #{tpu_custom_call.1} parent=11 // pred_region
          _
        $region24: #{tpu_custom_call.1} parent=11 // pred_fallthru
          _
      $region12: #{tpu_custom_call.1} parent=5 // pred_fallthru
        _
      %p155 = scmp.lt.s32.totalorder %s16, 2
      // Predicated region
      $region25: #{tpu_custom_call.1} parent=5 // pred_check
        %p156 = pneg %p155
      $region26: #{tpu_custom_call.1} parent=5 // pred_check_branch
        %158 = sbr.rel (%p156) target = $region28
      $region27: #{tpu_custom_call.1} parent=5 // pred_region
        // Predicated region
        $region29: #{tpu_custom_call.1} parent=27 // pred_check
          %p159 = pneg %p36
        $region30: #{tpu_custom_call.1} parent=27 // pred_check_branch
          %161 = sbr.rel (%p159) target = $region32
        $region31: #{tpu_custom_call.1} parent=27 // pred_region
          %s162 = sand.u32 %s26, 1
          %s163 = scalar_lea.sflag [#allocation3], %s162
          %s164 = sand.u32 %s26, 1
          %s165 = smul.addr %s164, 8
          %s166 = scalar_lea.vmem [#allocation2], %s165
          %s168 = ssub.s32 128, 128
          %169 = vsyncadd %s163, %s168
          %s170 = smul.addr %s16, 128
          %s171 = scalar_lea.hbm %s0, %s170
          %s173 = sshll.u32 %s166, 4
          %s174 = int_to_ptr.vmem [resolvable:$true] %s173
          %176 = dma.hbm_to_vmem [thread:$0]  %s171, 128, %s174, %s163
        $region32: #{tpu_custom_call.1} parent=27 // pred_fallthru
          _
      $region28: #{tpu_custom_call.1} parent=5 // pred_fallthru
        _
      %p177 = scmp.le.s32.totalorder 1, %s16
      %p178 = scmp.lt.s32.totalorder %s16, 3
      %p179 = pnand %p177, %p178
      %p180 = pneg %p179
      // Predicated region
      $region33: #{tpu_custom_call.1} parent=5 // pred_check
        _
      $region34: #{tpu_custom_call.1} parent=5 // pred_check_branch
        %182 = sbr.rel (%p179) target = $region36
      $region35: #{tpu_custom_call.1} parent=5 // pred_region
        %s183 = ssub.s32 %s16, 1
        %s184 = sand.u32 %s29, 1
        %s185 = scalar_lea.sflag [#allocation3], %s184
        %s186 = sand.u32 %s29, 1
        %s187 = smul.addr %s186, 8
        %s188 = scalar_lea.vmem [#allocation2], %s187
        // Predicated region
        $region37: #{tpu_custom_call.1} parent=35 // pred_check
          %p189 = pneg %p42
        $region38: #{tpu_custom_call.1} parent=35 // pred_check_branch
          %191 = sbr.rel (%p189) target = $region40
        $region39: #{tpu_custom_call.1} parent=35 // pred_region
          %192 = dma.done %s185, 128
        $region40: #{tpu_custom_call.1} parent=35 // pred_fallthru
          _
        %s193 = sand.u32 %s29, 1
        %s194 = scalar_lea.sflag [#allocation3], %s193
        %s195 = sand.u32 %s29, 1
        %s196 = smul.addr %s195, 8
        %s197 = scalar_lea.vmem [#allocation2], %s196
        %p198 = pneg %p42
        %p199 = pneg %p39
        %p200 = pneg %p63
        %p201 = pneg %p60
        %p202 = pneg %p84
        %p203 = pneg %p81
        %p204 = pneg %p105
        %p205 = pneg %p102
        %p206 = pneg %p131
        %p207 = pneg %p128
        %s208 = sand.u32 %s118, 1
        %s209 = scalar_lea.sflag [#allocation4], %s208
        %s210 = sand.u32 %s118, 1
        %s211 = smul.addr %s210, 1024
        %s212 = scalar_lea.vmem [#allocation5], %s211
        %s213 = smul.u32 128, %s21
        %v214 = vld [vmem:[%s1] sm:$0x1]
        %v215 = vld [vmem:[%s2] sm:$0x1]
        %v216 = vld [vmem:[%s3] sm:$0x1]
        %v217 = vld [vmem:[%s188] sm:$0xff]
        %218 = vxpose.xlu0.b32.start [1/16] %v217, 128
        %219 = vxpose.xlu0.b32.cont [2/16] 0.0, 128
        %220 = vxpose.xlu0.b32.cont [3/16] 0.0, 128
        %221 = vxpose.xlu0.b32.cont [4/16] 0.0, 128
        %222 = vxpose.xlu0.b32.cont [5/16] 0.0, 128
        %223 = vxpose.xlu0.b32.cont [6/16] 0.0, 128
        %224 = vxpose.xlu0.b32.cont [7/16] 0.0, 128
        %225 = vxpose.xlu0.b32.cont [8/16] 0.0, 128
        %226 = vxpose.xlu0.b32.cont [9/16] 0.0, 128
        %227 = vxpose.xlu0.b32.cont [10/16] 0.0, 128
        %228 = vxpose.xlu0.b32.cont [11/16] 0.0, 128
        %229 = vxpose.xlu0.b32.cont [12/16] 0.0, 128
        %230 = vxpose.xlu0.b32.cont [13/16] 0.0, 128
        %231 = vxpose.xlu0.b32.cont [14/16] 0.0, 128
        %232 = vxpose.xlu0.b32.cont [15/16] 0.0, 128
        %233 = vxpose.xlu0.b32.end [16/16] 0.0, 128
        %v234 = vpop.trf.xlu0
        %v235 = vpop.trf.xlu0
        %v236 = vpop.trf.xlu0
        %v237 = vpop.trf.xlu0
        %v238 = vpop.trf.xlu0
        %v239 = vpop.trf.xlu0
        %v240 = vpop.trf.xlu0
        %v241 = vpop.trf.xlu0
        %v242 = vpop.trf.xlu0
        %v243 = vpop.trf.xlu0
        %v244 = vpop.trf.xlu0
        %v245 = vpop.trf.xlu0
        %v246 = vpop.trf.xlu0
        %v247 = vpop.trf.xlu0
        %v248 = vpop.trf.xlu0
        %v249 = vpop.trf.xlu0
        %251 = vset.pattern.permute.xlu0 0
        %252 = vperm.xlu0 %251, %v234
        %v253 = vpop.permute.xlu0 %252
        %256 = vset.pattern.permute.xlu0 0
        %257 = vperm.xlu0 %256, %v235
        %v258 = vpop.permute.xlu0 %257
        %261 = vset.pattern.permute.xlu0 0
        %262 = vperm.xlu0 %261, %v236
        %v263 = vpop.permute.xlu0 %262
        %266 = vset.pattern.permute.xlu0 0
        %267 = vperm.xlu0 %266, %v237
        %v268 = vpop.permute.xlu0 %267
        %271 = vset.pattern.permute.xlu0 0
        %272 = vperm.xlu0 %271, %v238
        %v273 = vpop.permute.xlu0 %272
        %276 = vset.pattern.permute.xlu0 0
        %277 = vperm.xlu0 %276, %v239
        %v278 = vpop.permute.xlu0 %277
        %281 = vset.pattern.permute.xlu0 0
        %282 = vperm.xlu0 %281, %v240
        %v283 = vpop.permute.xlu0 %282
        %286 = vset.pattern.permute.xlu0 0
        %287 = vperm.xlu0 %286, %v241
        %v288 = vpop.permute.xlu0 %287
        %291 = vset.pattern.permute.xlu0 0
        %292 = vperm.xlu0 %291, %v242
        %v293 = vpop.permute.xlu0 %292
        %296 = vset.pattern.permute.xlu0 0
        %297 = vperm.xlu0 %296, %v243
        %v298 = vpop.permute.xlu0 %297
        %301 = vset.pattern.permute.xlu0 0
        %302 = vperm.xlu0 %301, %v244
        %v303 = vpop.permute.xlu0 %302
        %306 = vset.pattern.permute.xlu0 0
        %307 = vperm.xlu0 %306, %v245
        %v308 = vpop.permute.xlu0 %307
        %311 = vset.pattern.permute.xlu0 0
        %312 = vperm.xlu0 %311, %v246
        %v313 = vpop.permute.xlu0 %312
        %316 = vset.pattern.permute.xlu0 0
        %317 = vperm.xlu0 %316, %v247
        %v318 = vpop.permute.xlu0 %317
        %321 = vset.pattern.permute.xlu0 0
        %322 = vperm.xlu0 %321, %v248
        %v323 = vpop.permute.xlu0 %322
        %326 = vset.pattern.permute.xlu0 0
        %327 = vperm.xlu0 %326, %v249
        %v328 = vpop.permute.xlu0 %327
        %v331 = vlaneseq
        %v332 = vshrl.u32 %v331, 7
        %v333 = vsub.s32 0, %v332
        %v334 = vrot.slane %v214, %v333
        %v336 = vsub.f32 %v253, %v334
        %v337 = vsub.f32 %v258, %v334
        %v338 = vsub.f32 %v263, %v334
        %v339 = vsub.f32 %v268, %v334
        %v340 = vsub.f32 %v273, %v334
        %v341 = vsub.f32 %v278, %v334
        %v342 = vsub.f32 %v283, %v334
        %v343 = vsub.f32 %v288, %v334
        %v344 = vsub.f32 %v293, %v334
        %v345 = vsub.f32 %v298, %v334
        %v346 = vsub.f32 %v303, %v334
        %v347 = vsub.f32 %v308, %v334
        %v348 = vsub.f32 %v313, %v334
        %v349 = vsub.f32 %v318, %v334
        %v350 = vsub.f32 %v323, %v334
        %v351 = vsub.f32 %v328, %v334
        %v352 = vmul.f32 %v336, %v336
        %v353 = vmul.f32 %v337, %v337
        %v354 = vmul.f32 %v338, %v338
        %v355 = vmul.f32 %v339, %v339
        %v356 = vmul.f32 %v340, %v340
        %v357 = vmul.f32 %v341, %v341
        %v358 = vmul.f32 %v342, %v342
        %v359 = vmul.f32 %v343, %v343
        %v360 = vmul.f32 %v344, %v344
        %v361 = vmul.f32 %v345, %v345
        %v362 = vmul.f32 %v346, %v346
        %v363 = vmul.f32 %v347, %v347
        %v364 = vmul.f32 %v348, %v348
        %v365 = vmul.f32 %v349, %v349
        %v366 = vmul.f32 %v350, %v350
        %v367 = vmul.f32 %v351, %v351
        %v369 = vlaneseq
        %v370 = vshrl.u32 %v369, 7
        %v371 = vsub.s32 0, %v370
        %v372 = vrot.slane %v215, %v371
        %v374 = vmul.f32 %v352, %v372
        %v375 = vmul.f32 %v353, %v372
        %v376 = vmul.f32 %v354, %v372
        %v377 = vmul.f32 %v355, %v372
        %v378 = vmul.f32 %v356, %v372
        %v379 = vmul.f32 %v357, %v372
        %v380 = vmul.f32 %v358, %v372
        %v381 = vmul.f32 %v359, %v372
        %v382 = vmul.f32 %v360, %v372
        %v383 = vmul.f32 %v361, %v372
        %v384 = vmul.f32 %v362, %v372
        %v385 = vmul.f32 %v363, %v372
        %v386 = vmul.f32 %v364, %v372
        %v387 = vmul.f32 %v365, %v372
        %v388 = vmul.f32 %v366, %v372
        %v389 = vmul.f32 %v367, %v372
        %v390 = vmul.f32 %v374, 1.442695
        %v391 = vpow.pop %v390
        %v392 = vmul.f32 %v375, 1.442695
        %v393 = vpow.pop %v392
        %v394 = vmul.f32 %v376, 1.442695
        %v395 = vpow.pop %v394
        %v396 = vmul.f32 %v377, 1.442695
        %v397 = vpow.pop %v396
        %v398 = vmul.f32 %v378, 1.442695
        %v399 = vpow.pop %v398
        %v400 = vmul.f32 %v379, 1.442695
        %v401 = vpow.pop %v400
        %v402 = vmul.f32 %v380, 1.442695
        %v403 = vpow.pop %v402
        %v404 = vmul.f32 %v381, 1.442695
        %v405 = vpow.pop %v404
        %v406 = vmul.f32 %v382, 1.442695
        %v407 = vpow.pop %v406
        %v408 = vmul.f32 %v383, 1.442695
        %v409 = vpow.pop %v408
        %v410 = vmul.f32 %v384, 1.442695
        %v411 = vpow.pop %v410
        %v412 = vmul.f32 %v385, 1.442695
        %v413 = vpow.pop %v412
        %v414 = vmul.f32 %v386, 1.442695
        %v415 = vpow.pop %v414
        %v416 = vmul.f32 %v387, 1.442695
        %v417 = vpow.pop %v416
        %v418 = vmul.f32 %v388, 1.442695
        %v419 = vpow.pop %v418
        %v420 = vmul.f32 %v389, 1.442695
        %v421 = vpow.pop %v420
        %v423 = vlaneseq
        %v424 = vshrl.u32 %v423, 7
        %v425 = vsub.s32 0, %v424
        %v426 = vrot.slane %v216, %v425
        %v428 = vmul.f32 %v391, %v426
        %v429 = vmul.f32 %v393, %v426
        %v430 = vmul.f32 %v395, %v426
        %v431 = vmul.f32 %v397, %v426
        %v432 = vmul.f32 %v399, %v426
        %v433 = vmul.f32 %v401, %v426
        %v434 = vmul.f32 %v403, %v426
        %v435 = vmul.f32 %v405, %v426
        %v436 = vmul.f32 %v407, %v426
        %v437 = vmul.f32 %v409, %v426
        %v438 = vmul.f32 %v411, %v426
        %v439 = vmul.f32 %v413, %v426
        %v440 = vmul.f32 %v415, %v426
        %v441 = vmul.f32 %v417, %v426
        %v442 = vmul.f32 %v419, %v426
        %v443 = vmul.f32 %v421, %v426
        %444 = vst [vmem:[%s212] sm:$0xff] %v428
        %445 = vst [vmem:[%s212 + $0x8] sm:$0xff] %v429
        %446 = vst [vmem:[%s212 + $0x10] sm:$0xff] %v430
        %447 = vst [vmem:[%s212 + $0x18] sm:$0xff] %v431
        %448 = vst [vmem:[%s212 + $0x20] sm:$0xff] %v432
        %449 = vst [vmem:[%s212 + $0x28] sm:$0xff] %v433
        %450 = vst [vmem:[%s212 + $0x30] sm:$0xff] %v434
        %451 = vst [vmem:[%s212 + $0x38] sm:$0xff] %v435
        %452 = vst [vmem:[%s212 + $0x40] sm:$0xff] %v436
        %453 = vst [vmem:[%s212 + $0x48] sm:$0xff] %v437
        %454 = vst [vmem:[%s212 + $0x50] sm:$0xff] %v438
        %455 = vst [vmem:[%s212 + $0x58] sm:$0xff] %v439
        %456 = vst [vmem:[%s212 + $0x60] sm:$0xff] %v440
        %457 = vst [vmem:[%s212 + $0x68] sm:$0xff] %v441
        %458 = vst [vmem:[%s212 + $0x70] sm:$0xff] %v442
        %459 = vst [vmem:[%s212 + $0x78] sm:$0xff] %v443
        %460 = vset.pattern.permute.xlu0 1
        %461 = vperm.xlu0 %460, %v234
        %v462 = vpop.permute.xlu0 %461
        %464 = vset.pattern.permute.xlu0 1
        %465 = vperm.xlu0 %464, %v235
        %v466 = vpop.permute.xlu0 %465
        %468 = vset.pattern.permute.xlu0 1
        %469 = vperm.xlu0 %468, %v236
        %v470 = vpop.permute.xlu0 %469
        %472 = vset.pattern.permute.xlu0 1
        %473 = vperm.xlu0 %472, %v237
        %v474 = vpop.permute.xlu0 %473
        %476 = vset.pattern.permute.xlu0 1
        %477 = vperm.xlu0 %476, %v238
        %v478 = vpop.permute.xlu0 %477
        %480 = vset.pattern.permute.xlu0 1
        %481 = vperm.xlu0 %480, %v239
        %v482 = vpop.permute.xlu0 %481
        %484 = vset.pattern.permute.xlu0 1
        %485 = vperm.xlu0 %484, %v240
        %v486 = vpop.permute.xlu0 %485
        %488 = vset.pattern.permute.xlu0 1
        %489 = vperm.xlu0 %488, %v241
        %v490 = vpop.permute.xlu0 %489
        %492 = vset.pattern.permute.xlu0 1
        %493 = vperm.xlu0 %492, %v242
        %v494 = vpop.permute.xlu0 %493
        %496 = vset.pattern.permute.xlu0 1
        %497 = vperm.xlu0 %496, %v243
        %v498 = vpop.permute.xlu0 %497
        %500 = vset.pattern.permute.xlu0 1
        %501 = vperm.xlu0 %500, %v244
        %v502 = vpop.permute.xlu0 %501
        %504 = vset.pattern.permute.xlu0 1
        %505 = vperm.xlu0 %504, %v245
        %v506 = vpop.permute.xlu0 %505
        %508 = vset.pattern.permute.xlu0 1
        %509 = vperm.xlu0 %508, %v246
        %v510 = vpop.permute.xlu0 %509
        %512 = vset.pattern.permute.xlu0 1
        %513 = vperm.xlu0 %512, %v247
        %v514 = vpop.permute.xlu0 %513
        %516 = vset.pattern.permute.xlu0 1
        %517 = vperm.xlu0 %516, %v248
        %v518 = vpop.permute.xlu0 %517
        %520 = vset.pattern.permute.xlu0 1
        %521 = vperm.xlu0 %520, %v249
        %v522 = vpop.permute.xlu0 %521
        %v524 = vsub.f32 %v462, %v334
        %v525 = vsub.f32 %v466, %v334
        %v526 = vsub.f32 %v470, %v334
        %v527 = vsub.f32 %v474, %v334
        %v528 = vsub.f32 %v478, %v334
        %v529 = vsub.f32 %v482, %v334
        %v530 = vsub.f32 %v486, %v334
        %v531 = vsub.f32 %v490, %v334
        %v532 = vsub.f32 %v494, %v334
        %v533 = vsub.f32 %v498, %v334
        %v534 = vsub.f32 %v502, %v334
        %v535 = vsub.f32 %v506, %v334
        %v536 = vsub.f32 %v510, %v334
        %v537 = vsub.f32 %v514, %v334
        %v538 = vsub.f32 %v518, %v334
        %v539 = vsub.f32 %v522, %v334
        %v540 = vmul.f32 %v524, %v524
        %v541 = vmul.f32 %v525, %v525
        %v542 = vmul.f32 %v526, %v526
        %v543 = vmul.f32 %v527, %v527
        %v544 = vmul.f32 %v528, %v528
        %v545 = vmul.f32 %v529, %v529
        %v546 = vmul.f32 %v530, %v530
        %v547 = vmul.f32 %v531, %v531
        %v548 = vmul.f32 %v532, %v532
        %v549 = vmul.f32 %v533, %v533
        %v550 = vmul.f32 %v534, %v534
        %v551 = vmul.f32 %v535, %v535
        %v552 = vmul.f32 %v536, %v536
        %v553 = vmul.f32 %v537, %v537
        %v554 = vmul.f32 %v538, %v538
        %v555 = vmul.f32 %v539, %v539
        %v556 = vmul.f32 %v540, %v372
        %v557 = vmul.f32 %v541, %v372
        %v558 = vmul.f32 %v542, %v372
        %v559 = vmul.f32 %v543, %v372
        %v560 = vmul.f32 %v544, %v372
        %v561 = vmul.f32 %v545, %v372
        %v562 = vmul.f32 %v546, %v372
        %v563 = vmul.f32 %v547, %v372
        %v564 = vmul.f32 %v548, %v372
        %v565 = vmul.f32 %v549, %v372
        %v566 = vmul.f32 %v550, %v372
        %v567 = vmul.f32 %v551, %v372
        %v568 = vmul.f32 %v552, %v372
        %v569 = vmul.f32 %v553, %v372
        %v570 = vmul.f32 %v554, %v372
        %v571 = vmul.f32 %v555, %v372
        %v572 = vmul.f32 %v556, 1.442695
        %v573 = vpow.pop %v572
        %v574 = vmul.f32 %v557, 1.442695
        %v575 = vpow.pop %v574
        %v576 = vmul.f32 %v558, 1.442695
        %v577 = vpow.pop %v576
        %v578 = vmul.f32 %v559, 1.442695
        %v579 = vpow.pop %v578
        %v580 = vmul.f32 %v560, 1.442695
        %v581 = vpow.pop %v580
        %v582 = vmul.f32 %v561, 1.442695
        %v583 = vpow.pop %v582
        %v584 = vmul.f32 %v562, 1.442695
        %v585 = vpow.pop %v584
        %v586 = vmul.f32 %v563, 1.442695
        %v587 = vpow.pop %v586
        %v588 = vmul.f32 %v564, 1.442695
        %v589 = vpow.pop %v588
        %v590 = vmul.f32 %v565, 1.442695
        %v591 = vpow.pop %v590
        %v592 = vmul.f32 %v566, 1.442695
        %v593 = vpow.pop %v592
        %v594 = vmul.f32 %v567, 1.442695
        %v595 = vpow.pop %v594
        %v596 = vmul.f32 %v568, 1.442695
        %v597 = vpow.pop %v596
        %v598 = vmul.f32 %v569, 1.442695
        %v599 = vpow.pop %v598
        %v600 = vmul.f32 %v570, 1.442695
        %v601 = vpow.pop %v600
        %v602 = vmul.f32 %v571, 1.442695
        %v603 = vpow.pop %v602
        %v604 = vmul.f32 %v573, %v426
        %v605 = vmul.f32 %v575, %v426
        %v606 = vmul.f32 %v577, %v426
        %v607 = vmul.f32 %v579, %v426
        %v608 = vmul.f32 %v581, %v426
        %v609 = vmul.f32 %v583, %v426
        %v610 = vmul.f32 %v585, %v426
        %v611 = vmul.f32 %v587, %v426
        %v612 = vmul.f32 %v589, %v426
        %v613 = vmul.f32 %v591, %v426
        %v614 = vmul.f32 %v593, %v426
        %v615 = vmul.f32 %v595, %v426
        %v616 = vmul.f32 %v597, %v426
        %v617 = vmul.f32 %v599, %v426
        %v618 = vmul.f32 %v601, %v426
        %v619 = vmul.f32 %v603, %v426
        %620 = vst [vmem:[%s212 + $0x80] sm:$0xff] %v604
        %621 = vst [vmem:[%s212 + $0x88] sm:$0xff] %v605
        %622 = vst [vmem:[%s212 + $0x90] sm:$0xff] %v606
        %623 = vst [vmem:[%s212 + $0x98] sm:$0xff] %v607
        %624 = vst [vmem:[%s212 + $0xa0] sm:$0xff] %v608
        %625 = vst [vmem:[%s212 + $0xa8] sm:$0xff] %v609
        %626 = vst [vmem:[%s212 + $0xb0] sm:$0xff] %v610
        %627 = vst [vmem:[%s212 + $0xb8] sm:$0xff] %v611
        %628 = vst [vmem:[%s212 + $0xc0] sm:$0xff] %v612
        %629 = vst [vmem:[%s212 + $0xc8] sm:$0xff] %v613
        %630 = vst [vmem:[%s212 + $0xd0] sm:$0xff] %v614
        %631 = vst [vmem:[%s212 + $0xd8] sm:$0xff] %v615
        %632 = vst [vmem:[%s212 + $0xe0] sm:$0xff] %v616
        %633 = vst [vmem:[%s212 + $0xe8] sm:$0xff] %v617
        %634 = vst [vmem:[%s212 + $0xf0] sm:$0xff] %v618
        %635 = vst [vmem:[%s212 + $0xf8] sm:$0xff] %v619
        %636 = vset.pattern.permute.xlu0 2
        %637 = vperm.xlu0 %636, %v234
        %v638 = vpop.permute.xlu0 %637
        %640 = vset.pattern.permute.xlu0 2
        %641 = vperm.xlu0 %640, %v235
        %v642 = vpop.permute.xlu0 %641
        %644 = vset.pattern.permute.xlu0 2
        %645 = vperm.xlu0 %644, %v236
        %v646 = vpop.permute.xlu0 %645
        %648 = vset.pattern.permute.xlu0 2
        %649 = vperm.xlu0 %648, %v237
        %v650 = vpop.permute.xlu0 %649
        %652 = vset.pattern.permute.xlu0 2
        %653 = vperm.xlu0 %652, %v238
        %v654 = vpop.permute.xlu0 %653
        %656 = vset.pattern.permute.xlu0 2
        %657 = vperm.xlu0 %656, %v239
        %v658 = vpop.permute.xlu0 %657
        %660 = vset.pattern.permute.xlu0 2
        %661 = vperm.xlu0 %660, %v240
        %v662 = vpop.permute.xlu0 %661
        %664 = vset.pattern.permute.xlu0 2
        %665 = vperm.xlu0 %664, %v241
        %v666 = vpop.permute.xlu0 %665
        %668 = vset.pattern.permute.xlu0 2
        %669 = vperm.xlu0 %668, %v242
        %v670 = vpop.permute.xlu0 %669
        %672 = vset.pattern.permute.xlu0 2
        %673 = vperm.xlu0 %672, %v243
        %v674 = vpop.permute.xlu0 %673
        %676 = vset.pattern.permute.xlu0 2
        %677 = vperm.xlu0 %676, %v244
        %v678 = vpop.permute.xlu0 %677
        %680 = vset.pattern.permute.xlu0 2
        %681 = vperm.xlu0 %680, %v245
        %v682 = vpop.permute.xlu0 %681
        %684 = vset.pattern.permute.xlu0 2
        %685 = vperm.xlu0 %684, %v246
        %v686 = vpop.permute.xlu0 %685
        %688 = vset.pattern.permute.xlu0 2
        %689 = vperm.xlu0 %688, %v247
        %v690 = vpop.permute.xlu0 %689
        %692 = vset.pattern.permute.xlu0 2
        %693 = vperm.xlu0 %692, %v248
        %v694 = vpop.permute.xlu0 %693
        %696 = vset.pattern.permute.xlu0 2
        %697 = vperm.xlu0 %696, %v249
        %v698 = vpop.permute.xlu0 %697
        %v700 = vsub.f32 %v638, %v334
        %v701 = vsub.f32 %v642, %v334
        %v702 = vsub.f32 %v646, %v334
        %v703 = vsub.f32 %v650, %v334
        %v704 = vsub.f32 %v654, %v334
        %v705 = vsub.f32 %v658, %v334
        %v706 = vsub.f32 %v662, %v334
        %v707 = vsub.f32 %v666, %v334
        %v708 = vsub.f32 %v670, %v334
        %v709 = vsub.f32 %v674, %v334
        %v710 = vsub.f32 %v678, %v334
        %v711 = vsub.f32 %v682, %v334
        %v712 = vsub.f32 %v686, %v334
        %v713 = vsub.f32 %v690, %v334
        %v714 = vsub.f32 %v694, %v334
        %v715 = vsub.f32 %v698, %v334
        %v716 = vmul.f32 %v700, %v700
        %v717 = vmul.f32 %v701, %v701
        %v718 = vmul.f32 %v702, %v702
        %v719 = vmul.f32 %v703, %v703
        %v720 = vmul.f32 %v704, %v704
        %v721 = vmul.f32 %v705, %v705
        %v722 = vmul.f32 %v706, %v706
        %v723 = vmul.f32 %v707, %v707
        %v724 = vmul.f32 %v708, %v708
        %v725 = vmul.f32 %v709, %v709
        %v726 = vmul.f32 %v710, %v710
        %v727 = vmul.f32 %v711, %v711
        %v728 = vmul.f32 %v712, %v712
        %v729 = vmul.f32 %v713, %v713
        %v730 = vmul.f32 %v714, %v714
        %v731 = vmul.f32 %v715, %v715
        %v732 = vmul.f32 %v716, %v372
        %v733 = vmul.f32 %v717, %v372
        %v734 = vmul.f32 %v718, %v372
        %v735 = vmul.f32 %v719, %v372
        %v736 = vmul.f32 %v720, %v372
        %v737 = vmul.f32 %v721, %v372
        %v738 = vmul.f32 %v722, %v372
        %v739 = vmul.f32 %v723, %v372
        %v740 = vmul.f32 %v724, %v372
        %v741 = vmul.f32 %v725, %v372
        %v742 = vmul.f32 %v726, %v372
        %v743 = vmul.f32 %v727, %v372
        %v744 = vmul.f32 %v728, %v372
        %v745 = vmul.f32 %v729, %v372
        %v746 = vmul.f32 %v730, %v372
        %v747 = vmul.f32 %v731, %v372
        %v748 = vmul.f32 %v732, 1.442695
        %v749 = vpow.pop %v748
        %v750 = vmul.f32 %v733, 1.442695
        %v751 = vpow.pop %v750
        %v752 = vmul.f32 %v734, 1.442695
        %v753 = vpow.pop %v752
        %v754 = vmul.f32 %v735, 1.442695
        %v755 = vpow.pop %v754
        %v756 = vmul.f32 %v736, 1.442695
        %v757 = vpow.pop %v756
        %v758 = vmul.f32 %v737, 1.442695
        %v759 = vpow.pop %v758
        %v760 = vmul.f32 %v738, 1.442695
        %v761 = vpow.pop %v760
        %v762 = vmul.f32 %v739, 1.442695
        %v763 = vpow.pop %v762
        %v764 = vmul.f32 %v740, 1.442695
        %v765 = vpow.pop %v764
        %v766 = vmul.f32 %v741, 1.442695
        %v767 = vpow.pop %v766
        %v768 = vmul.f32 %v742, 1.442695
        %v769 = vpow.pop %v768
        %v770 = vmul.f32 %v743, 1.442695
        %v771 = vpow.pop %v770
        %v772 = vmul.f32 %v744, 1.442695
        %v773 = vpow.pop %v772
        %v774 = vmul.f32 %v745, 1.442695
        %v775 = vpow.pop %v774
        %v776 = vmul.f32 %v746, 1.442695
        %v777 = vpow.pop %v776
        %v778 = vmul.f32 %v747, 1.442695
        %v779 = vpow.pop %v778
        %v780 = vmul.f32 %v749, %v426
        %v781 = vmul.f32 %v751, %v426
        %v782 = vmul.f32 %v753, %v426
        %v783 = vmul.f32 %v755, %v426
        %v784 = vmul.f32 %v757, %v426
        %v785 = vmul.f32 %v759, %v426
        %v786 = vmul.f32 %v761, %v426
        %v787 = vmul.f32 %v763, %v426
        %v788 = vmul.f32 %v765, %v426
        %v789 = vmul.f32 %v767, %v426
        %v790 = vmul.f32 %v769, %v426
        %v791 = vmul.f32 %v771, %v426
        %v792 = vmul.f32 %v773, %v426
        %v793 = vmul.f32 %v775, %v426
        %v794 = vmul.f32 %v777, %v426
        %v795 = vmul.f32 %v779, %v426
        %796 = vst [vmem:[%s212 + $0x100] sm:$0xff] %v780
        %797 = vst [vmem:[%s212 + $0x108] sm:$0xff] %v781
        %798 = vst [vmem:[%s212 + $0x110] sm:$0xff] %v782
        %799 = vst [vmem:[%s212 + $0x118] sm:$0xff] %v783
        %800 = vst [vmem:[%s212 + $0x120] sm:$0xff] %v784
        %801 = vst [vmem:[%s212 + $0x128] sm:$0xff] %v785
        %802 = vst [vmem:[%s212 + $0x130] sm:$0xff] %v786
        %803 = vst [vmem:[%s212 + $0x138] sm:$0xff] %v787
        %804 = vst [vmem:[%s212 + $0x140] sm:$0xff] %v788
        %805 = vst [vmem:[%s212 + $0x148] sm:$0xff] %v789
        %806 = vst [vmem:[%s212 + $0x150] sm:$0xff] %v790
        %807 = vst [vmem:[%s212 + $0x158] sm:$0xff] %v791
        %808 = vst [vmem:[%s212 + $0x160] sm:$0xff] %v792
        %809 = vst [vmem:[%s212 + $0x168] sm:$0xff] %v793
        %810 = vst [vmem:[%s212 + $0x170] sm:$0xff] %v794
        %811 = vst [vmem:[%s212 + $0x178] sm:$0xff] %v795
        %812 = vset.pattern.permute.xlu0 3
        %813 = vperm.xlu0 %812, %v234
        %v814 = vpop.permute.xlu0 %813
        %816 = vset.pattern.permute.xlu0 3
        %817 = vperm.xlu0 %816, %v235
        %v818 = vpop.permute.xlu0 %817
        %820 = vset.pattern.permute.xlu0 3
        %821 = vperm.xlu0 %820, %v236
        %v822 = vpop.permute.xlu0 %821
        %824 = vset.pattern.permute.xlu0 3
        %825 = vperm.xlu0 %824, %v237
        %v826 = vpop.permute.xlu0 %825
        %828 = vset.pattern.permute.xlu0 3
        %829 = vperm.xlu0 %828, %v238
        %v830 = vpop.permute.xlu0 %829
        %832 = vset.pattern.permute.xlu0 3
        %833 = vperm.xlu0 %832, %v239
        %v834 = vpop.permute.xlu0 %833
        %836 = vset.pattern.permute.xlu0 3
        %837 = vperm.xlu0 %836, %v240
        %v838 = vpop.permute.xlu0 %837
        %840 = vset.pattern.permute.xlu0 3
        %841 = vperm.xlu0 %840, %v241
        %v842 = vpop.permute.xlu0 %841
        %844 = vset.pattern.permute.xlu0 3
        %845 = vperm.xlu0 %844, %v242
        %v846 = vpop.permute.xlu0 %845
        %848 = vset.pattern.permute.xlu0 3
        %849 = vperm.xlu0 %848, %v243
        %v850 = vpop.permute.xlu0 %849
        %852 = vset.pattern.permute.xlu0 3
        %853 = vperm.xlu0 %852, %v244
        %v854 = vpop.permute.xlu0 %853
        %856 = vset.pattern.permute.xlu0 3
        %857 = vperm.xlu0 %856, %v245
        %v858 = vpop.permute.xlu0 %857
        %860 = vset.pattern.permute.xlu0 3
        %861 = vperm.xlu0 %860, %v246
        %v862 = vpop.permute.xlu0 %861
        %864 = vset.pattern.permute.xlu0 3
        %865 = vperm.xlu0 %864, %v247
        %v866 = vpop.permute.xlu0 %865
        %868 = vset.pattern.permute.xlu0 3
        %869 = vperm.xlu0 %868, %v248
        %v870 = vpop.permute.xlu0 %869
        %872 = vset.pattern.permute.xlu0 3
        %873 = vperm.xlu0 %872, %v249
        %v874 = vpop.permute.xlu0 %873
        %v876 = vsub.f32 %v814, %v334
        %v877 = vsub.f32 %v818, %v334
        %v878 = vsub.f32 %v822, %v334
        %v879 = vsub.f32 %v826, %v334
        %v880 = vsub.f32 %v830, %v334
        %v881 = vsub.f32 %v834, %v334
        %v882 = vsub.f32 %v838, %v334
        %v883 = vsub.f32 %v842, %v334
        %v884 = vsub.f32 %v846, %v334
        %v885 = vsub.f32 %v850, %v334
        %v886 = vsub.f32 %v854, %v334
        %v887 = vsub.f32 %v858, %v334
        %v888 = vsub.f32 %v862, %v334
        %v889 = vsub.f32 %v866, %v334
        %v890 = vsub.f32 %v870, %v334
        %v891 = vsub.f32 %v874, %v334
        %v892 = vmul.f32 %v876, %v876
        %v893 = vmul.f32 %v877, %v877
        %v894 = vmul.f32 %v878, %v878
        %v895 = vmul.f32 %v879, %v879
        %v896 = vmul.f32 %v880, %v880
        %v897 = vmul.f32 %v881, %v881
        %v898 = vmul.f32 %v882, %v882
        %v899 = vmul.f32 %v883, %v883
        %v900 = vmul.f32 %v884, %v884
        %v901 = vmul.f32 %v885, %v885
        %v902 = vmul.f32 %v886, %v886
        %v903 = vmul.f32 %v887, %v887
        %v904 = vmul.f32 %v888, %v888
        %v905 = vmul.f32 %v889, %v889
        %v906 = vmul.f32 %v890, %v890
        %v907 = vmul.f32 %v891, %v891
        %v908 = vmul.f32 %v892, %v372
        %v909 = vmul.f32 %v893, %v372
        %v910 = vmul.f32 %v894, %v372
        %v911 = vmul.f32 %v895, %v372
        %v912 = vmul.f32 %v896, %v372
        %v913 = vmul.f32 %v897, %v372
        %v914 = vmul.f32 %v898, %v372
        %v915 = vmul.f32 %v899, %v372
        %v916 = vmul.f32 %v900, %v372
        %v917 = vmul.f32 %v901, %v372
        %v918 = vmul.f32 %v902, %v372
        %v919 = vmul.f32 %v903, %v372
        %v920 = vmul.f32 %v904, %v372
        %v921 = vmul.f32 %v905, %v372
        %v922 = vmul.f32 %v906, %v372
        %v923 = vmul.f32 %v907, %v372
        %v924 = vmul.f32 %v908, 1.442695
        %v925 = vpow.pop %v924
        %v926 = vmul.f32 %v909, 1.442695
        %v927 = vpow.pop %v926
        %v928 = vmul.f32 %v910, 1.442695
        %v929 = vpow.pop %v928
        %v930 = vmul.f32 %v911, 1.442695
        %v931 = vpow.pop %v930
        %v932 = vmul.f32 %v912, 1.442695
        %v933 = vpow.pop %v932
        %v934 = vmul.f32 %v913, 1.442695
        %v935 = vpow.pop %v934
        %v936 = vmul.f32 %v914, 1.442695
        %v937 = vpow.pop %v936
        %v938 = vmul.f32 %v915, 1.442695
        %v939 = vpow.pop %v938
        %v940 = vmul.f32 %v916, 1.442695
        %v941 = vpow.pop %v940
        %v942 = vmul.f32 %v917, 1.442695
        %v943 = vpow.pop %v942
        %v944 = vmul.f32 %v918, 1.442695
        %v945 = vpow.pop %v944
        %v946 = vmul.f32 %v919, 1.442695
        %v947 = vpow.pop %v946
        %v948 = vmul.f32 %v920, 1.442695
        %v949 = vpow.pop %v948
        %v950 = vmul.f32 %v921, 1.442695
        %v951 = vpow.pop %v950
        %v952 = vmul.f32 %v922, 1.442695
        %v953 = vpow.pop %v952
        %v954 = vmul.f32 %v923, 1.442695
        %v955 = vpow.pop %v954
        %v956 = vmul.f32 %v925, %v426
        %v957 = vmul.f32 %v927, %v426
        %v958 = vmul.f32 %v929, %v426
        %v959 = vmul.f32 %v931, %v426
        %v960 = vmul.f32 %v933, %v426
        %v961 = vmul.f32 %v935, %v426
        %v962 = vmul.f32 %v937, %v426
        %v963 = vmul.f32 %v939, %v426
        %v964 = vmul.f32 %v941, %v426
        %v965 = vmul.f32 %v943, %v426
        %v966 = vmul.f32 %v945, %v426
        %v967 = vmul.f32 %v947, %v426
        %v968 = vmul.f32 %v949, %v426
        %v969 = vmul.f32 %v951, %v426
        %v970 = vmul.f32 %v953, %v426
        %v971 = vmul.f32 %v955, %v426
        %972 = vst [vmem:[%s212 + $0x180] sm:$0xff] %v956
        %973 = vst [vmem:[%s212 + $0x188] sm:$0xff] %v957
        %974 = vst [vmem:[%s212 + $0x190] sm:$0xff] %v958
        %975 = vst [vmem:[%s212 + $0x198] sm:$0xff] %v959
        %976 = vst [vmem:[%s212 + $0x1a0] sm:$0xff] %v960
        %977 = vst [vmem:[%s212 + $0x1a8] sm:$0xff] %v961
        %978 = vst [vmem:[%s212 + $0x1b0] sm:$0xff] %v962
        %979 = vst [vmem:[%s212 + $0x1b8] sm:$0xff] %v963
        %980 = vst [vmem:[%s212 + $0x1c0] sm:$0xff] %v964
        %981 = vst [vmem:[%s212 + $0x1c8] sm:$0xff] %v965
        %982 = vst [vmem:[%s212 + $0x1d0] sm:$0xff] %v966
        %983 = vst [vmem:[%s212 + $0x1d8] sm:$0xff] %v967
        %984 = vst [vmem:[%s212 + $0x1e0] sm:$0xff] %v968
        %985 = vst [vmem:[%s212 + $0x1e8] sm:$0xff] %v969
        %986 = vst [vmem:[%s212 + $0x1f0] sm:$0xff] %v970
        %987 = vst [vmem:[%s212 + $0x1f8] sm:$0xff] %v971
        %988 = vset.pattern.permute.xlu0 4
        %989 = vperm.xlu0 %988, %v234
        %v990 = vpop.permute.xlu0 %989
        %992 = vset.pattern.permute.xlu0 4
        %993 = vperm.xlu0 %992, %v235
        %v994 = vpop.permute.xlu0 %993
        %996 = vset.pattern.permute.xlu0 4
        %997 = vperm.xlu0 %996, %v236
        %v998 = vpop.permute.xlu0 %997
        %1000 = vset.pattern.permute.xlu0 4
        %1001 = vperm.xlu0 %1000, %v237
        %v1002 = vpop.permute.xlu0 %1001
        %1004 = vset.pattern.permute.xlu0 4
        %1005 = vperm.xlu0 %1004, %v238
        %v1006 = vpop.permute.xlu0 %1005
        %1008 = vset.pattern.permute.xlu0 4
        %1009 = vperm.xlu0 %1008, %v239
        %v1010 = vpop.permute.xlu0 %1009
        %1012 = vset.pattern.permute.xlu0 4
        %1013 = vperm.xlu0 %1012, %v240
        %v1014 = vpop.permute.xlu0 %1013
        %1016 = vset.pattern.permute.xlu0 4
        %1017 = vperm.xlu0 %1016, %v241
        %v1018 = vpop.permute.xlu0 %1017
        %1020 = vset.pattern.permute.xlu0 4
        %1021 = vperm.xlu0 %1020, %v242
        %v1022 = vpop.permute.xlu0 %1021
        %1024 = vset.pattern.permute.xlu0 4
        %1025 = vperm.xlu0 %1024, %v243
        %v1026 = vpop.permute.xlu0 %1025
        %1028 = vset.pattern.permute.xlu0 4
        %1029 = vperm.xlu0 %1028, %v244
        %v1030 = vpop.permute.xlu0 %1029
        %1032 = vset.pattern.permute.xlu0 4
        %1033 = vperm.xlu0 %1032, %v245
        %v1034 = vpop.permute.xlu0 %1033
        %1036 = vset.pattern.permute.xlu0 4
        %1037 = vperm.xlu0 %1036, %v246
        %v1038 = vpop.permute.xlu0 %1037
        %1040 = vset.pattern.permute.xlu0 4
        %1041 = vperm.xlu0 %1040, %v247
        %v1042 = vpop.permute.xlu0 %1041
        %1044 = vset.pattern.permute.xlu0 4
        %1045 = vperm.xlu0 %1044, %v248
        %v1046 = vpop.permute.xlu0 %1045
        %1048 = vset.pattern.permute.xlu0 4
        %1049 = vperm.xlu0 %1048, %v249
        %v1050 = vpop.permute.xlu0 %1049
        %v1052 = vsub.f32 %v990, %v334
        %v1053 = vsub.f32 %v994, %v334
        %v1054 = vsub.f32 %v998, %v334
        %v1055 = vsub.f32 %v1002, %v334
        %v1056 = vsub.f32 %v1006, %v334
        %v1057 = vsub.f32 %v1010, %v334
        %v1058 = vsub.f32 %v1014, %v334
        %v1059 = vsub.f32 %v1018, %v334
        %v1060 = vsub.f32 %v1022, %v334
        %v1061 = vsub.f32 %v1026, %v334
        %v1062 = vsub.f32 %v1030, %v334
        %v1063 = vsub.f32 %v1034, %v334
        %v1064 = vsub.f32 %v1038, %v334
        %v1065 = vsub.f32 %v1042, %v334
        %v1066 = vsub.f32 %v1046, %v334
        %v1067 = vsub.f32 %v1050, %v334
        %v1068 = vmul.f32 %v1052, %v1052
        %v1069 = vmul.f32 %v1053, %v1053
        %v1070 = vmul.f32 %v1054, %v1054
        %v1071 = vmul.f32 %v1055, %v1055
        %v1072 = vmul.f32 %v1056, %v1056
        %v1073 = vmul.f32 %v1057, %v1057
        %v1074 = vmul.f32 %v1058, %v1058
        %v1075 = vmul.f32 %v1059, %v1059
        %v1076 = vmul.f32 %v1060, %v1060
        %v1077 = vmul.f32 %v1061, %v1061
        %v1078 = vmul.f32 %v1062, %v1062
        %v1079 = vmul.f32 %v1063, %v1063
        %v1080 = vmul.f32 %v1064, %v1064
        %v1081 = vmul.f32 %v1065, %v1065
        %v1082 = vmul.f32 %v1066, %v1066
        %v1083 = vmul.f32 %v1067, %v1067
        %v1084 = vmul.f32 %v1068, %v372
        %v1085 = vmul.f32 %v1069, %v372
        %v1086 = vmul.f32 %v1070, %v372
        %v1087 = vmul.f32 %v1071, %v372
        %v1088 = vmul.f32 %v1072, %v372
        %v1089 = vmul.f32 %v1073, %v372
        %v1090 = vmul.f32 %v1074, %v372
        %v1091 = vmul.f32 %v1075, %v372
        %v1092 = vmul.f32 %v1076, %v372
        %v1093 = vmul.f32 %v1077, %v372
        %v1094 = vmul.f32 %v1078, %v372
        %v1095 = vmul.f32 %v1079, %v372
        %v1096 = vmul.f32 %v1080, %v372
        %v1097 = vmul.f32 %v1081, %v372
        %v1098 = vmul.f32 %v1082, %v372
        %v1099 = vmul.f32 %v1083, %v372
        %v1100 = vmul.f32 %v1084, 1.442695
        %v1101 = vpow.pop %v1100
        %v1102 = vmul.f32 %v1085, 1.442695
        %v1103 = vpow.pop %v1102
        %v1104 = vmul.f32 %v1086, 1.442695
        %v1105 = vpow.pop %v1104
        %v1106 = vmul.f32 %v1087, 1.442695
        %v1107 = vpow.pop %v1106
        %v1108 = vmul.f32 %v1088, 1.442695
        %v1109 = vpow.pop %v1108
        %v1110 = vmul.f32 %v1089, 1.442695
        %v1111 = vpow.pop %v1110
        %v1112 = vmul.f32 %v1090, 1.442695
        %v1113 = vpow.pop %v1112
        %v1114 = vmul.f32 %v1091, 1.442695
        %v1115 = vpow.pop %v1114
        %v1116 = vmul.f32 %v1092, 1.442695
        %v1117 = vpow.pop %v1116
        %v1118 = vmul.f32 %v1093, 1.442695
        %v1119 = vpow.pop %v1118
        %v1120 = vmul.f32 %v1094, 1.442695
        %v1121 = vpow.pop %v1120
        %v1122 = vmul.f32 %v1095, 1.442695
        %v1123 = vpow.pop %v1122
        %v1124 = vmul.f32 %v1096, 1.442695
        %v1125 = vpow.pop %v1124
        %v1126 = vmul.f32 %v1097, 1.442695
        %v1127 = vpow.pop %v1126
        %v1128 = vmul.f32 %v1098, 1.442695
        %v1129 = vpow.pop %v1128
        %v1130 = vmul.f32 %v1099, 1.442695
        %v1131 = vpow.pop %v1130
        %v1132 = vmul.f32 %v1101, %v426
        %v1133 = vmul.f32 %v1103, %v426
        %v1134 = vmul.f32 %v1105, %v426
        %v1135 = vmul.f32 %v1107, %v426
        %v1136 = vmul.f32 %v1109, %v426
        %v1137 = vmul.f32 %v1111, %v426
        %v1138 = vmul.f32 %v1113, %v426
        %v1139 = vmul.f32 %v1115, %v426
        %v1140 = vmul.f32 %v1117, %v426
        %v1141 = vmul.f32 %v1119, %v426
        %v1142 = vmul.f32 %v1121, %v426
        %v1143 = vmul.f32 %v1123, %v426
        %v1144 = vmul.f32 %v1125, %v426
        %v1145 = vmul.f32 %v1127, %v426
        %v1146 = vmul.f32 %v1129, %v426
        %v1147 = vmul.f32 %v1131, %v426
        %1148 = vst [vmem:[%s212 + $0x200] sm:$0xff] %v1132
        %1149 = vst [vmem:[%s212 + $0x208] sm:$0xff] %v1133
        %1150 = vst [vmem:[%s212 + $0x210] sm:$0xff] %v1134
        %1151 = vst [vmem:[%s212 + $0x218] sm:$0xff] %v1135
        %1152 = vst [vmem:[%s212 + $0x220] sm:$0xff] %v1136
        %1153 = vst [vmem:[%s212 + $0x228] sm:$0xff] %v1137
        %1154 = vst [vmem:[%s212 + $0x230] sm:$0xff] %v1138
        %1155 = vst [vmem:[%s212 + $0x238] sm:$0xff] %v1139
        %1156 = vst [vmem:[%s212 + $0x240] sm:$0xff] %v1140
        %1157 = vst [vmem:[%s212 + $0x248] sm:$0xff] %v1141
        %1158 = vst [vmem:[%s212 + $0x250] sm:$0xff] %v1142
        %1159 = vst [vmem:[%s212 + $0x258] sm:$0xff] %v1143
        %1160 = vst [vmem:[%s212 + $0x260] sm:$0xff] %v1144
        %1161 = vst [vmem:[%s212 + $0x268] sm:$0xff] %v1145
        %1162 = vst [vmem:[%s212 + $0x270] sm:$0xff] %v1146
        %1163 = vst [vmem:[%s212 + $0x278] sm:$0xff] %v1147
        %1164 = vset.pattern.permute.xlu0 5
        %1165 = vperm.xlu0 %1164, %v234
        %v1166 = vpop.permute.xlu0 %1165
        %1168 = vset.pattern.permute.xlu0 5
        %1169 = vperm.xlu0 %1168, %v235
        %v1170 = vpop.permute.xlu0 %1169
        %1172 = vset.pattern.permute.xlu0 5
        %1173 = vperm.xlu0 %1172, %v236
        %v1174 = vpop.permute.xlu0 %1173
        %1176 = vset.pattern.permute.xlu0 5
        %1177 = vperm.xlu0 %1176, %v237
        %v1178 = vpop.permute.xlu0 %1177
        %1180 = vset.pattern.permute.xlu0 5
        %1181 = vperm.xlu0 %1180, %v238
        %v1182 = vpop.permute.xlu0 %1181
        %1184 = vset.pattern.permute.xlu0 5
        %1185 = vperm.xlu0 %1184, %v239
        %v1186 = vpop.permute.xlu0 %1185
        %1188 = vset.pattern.permute.xlu0 5
        %1189 = vperm.xlu0 %1188, %v240
        %v1190 = vpop.permute.xlu0 %1189
        %1192 = vset.pattern.permute.xlu0 5
        %1193 = vperm.xlu0 %1192, %v241
        %v1194 = vpop.permute.xlu0 %1193
        %1196 = vset.pattern.permute.xlu0 5
        %1197 = vperm.xlu0 %1196, %v242
        %v1198 = vpop.permute.xlu0 %1197
        %1200 = vset.pattern.permute.xlu0 5
        %1201 = vperm.xlu0 %1200, %v243
        %v1202 = vpop.permute.xlu0 %1201
        %1204 = vset.pattern.permute.xlu0 5
        %1205 = vperm.xlu0 %1204, %v244
        %v1206 = vpop.permute.xlu0 %1205
        %1208 = vset.pattern.permute.xlu0 5
        %1209 = vperm.xlu0 %1208, %v245
        %v1210 = vpop.permute.xlu0 %1209
        %1212 = vset.pattern.permute.xlu0 5
        %1213 = vperm.xlu0 %1212, %v246
        %v1214 = vpop.permute.xlu0 %1213
        %1216 = vset.pattern.permute.xlu0 5
        %1217 = vperm.xlu0 %1216, %v247
        %v1218 = vpop.permute.xlu0 %1217
        %1220 = vset.pattern.permute.xlu0 5
        %1221 = vperm.xlu0 %1220, %v248
        %v1222 = vpop.permute.xlu0 %1221
        %1224 = vset.pattern.permute.xlu0 5
        %1225 = vperm.xlu0 %1224, %v249
        %v1226 = vpop.permute.xlu0 %1225
        %v1228 = vsub.f32 %v1166, %v334
        %v1229 = vsub.f32 %v1170, %v334
        %v1230 = vsub.f32 %v1174, %v334
        %v1231 = vsub.f32 %v1178, %v334
        %v1232 = vsub.f32 %v1182, %v334
        %v1233 = vsub.f32 %v1186, %v334
        %v1234 = vsub.f32 %v1190, %v334
        %v1235 = vsub.f32 %v1194, %v334
        %v1236 = vsub.f32 %v1198, %v334
        %v1237 = vsub.f32 %v1202, %v334
        %v1238 = vsub.f32 %v1206, %v334
        %v1239 = vsub.f32 %v1210, %v334
        %v1240 = vsub.f32 %v1214, %v334
        %v1241 = vsub.f32 %v1218, %v334
        %v1242 = vsub.f32 %v1222, %v334
        %v1243 = vsub.f32 %v1226, %v334
        %v1244 = vmul.f32 %v1228, %v1228
        %v1245 = vmul.f32 %v1229, %v1229
        %v1246 = vmul.f32 %v1230, %v1230
        %v1247 = vmul.f32 %v1231, %v1231
        %v1248 = vmul.f32 %v1232, %v1232
        %v1249 = vmul.f32 %v1233, %v1233
        %v1250 = vmul.f32 %v1234, %v1234
        %v1251 = vmul.f32 %v1235, %v1235
        %v1252 = vmul.f32 %v1236, %v1236
        %v1253 = vmul.f32 %v1237, %v1237
        %v1254 = vmul.f32 %v1238, %v1238
        %v1255 = vmul.f32 %v1239, %v1239
        %v1256 = vmul.f32 %v1240, %v1240
        %v1257 = vmul.f32 %v1241, %v1241
        %v1258 = vmul.f32 %v1242, %v1242
        %v1259 = vmul.f32 %v1243, %v1243
        %v1260 = vmul.f32 %v1244, %v372
        %v1261 = vmul.f32 %v1245, %v372
        %v1262 = vmul.f32 %v1246, %v372
        %v1263 = vmul.f32 %v1247, %v372
        %v1264 = vmul.f32 %v1248, %v372
        %v1265 = vmul.f32 %v1249, %v372
        %v1266 = vmul.f32 %v1250, %v372
        %v1267 = vmul.f32 %v1251, %v372
        %v1268 = vmul.f32 %v1252, %v372
        %v1269 = vmul.f32 %v1253, %v372
        %v1270 = vmul.f32 %v1254, %v372
        %v1271 = vmul.f32 %v1255, %v372
        %v1272 = vmul.f32 %v1256, %v372
        %v1273 = vmul.f32 %v1257, %v372
        %v1274 = vmul.f32 %v1258, %v372
        %v1275 = vmul.f32 %v1259, %v372
        %v1276 = vmul.f32 %v1260, 1.442695
        %v1277 = vpow.pop %v1276
        %v1278 = vmul.f32 %v1261, 1.442695
        %v1279 = vpow.pop %v1278
        %v1280 = vmul.f32 %v1262, 1.442695
        %v1281 = vpow.pop %v1280
        %v1282 = vmul.f32 %v1263, 1.442695
        %v1283 = vpow.pop %v1282
        %v1284 = vmul.f32 %v1264, 1.442695
        %v1285 = vpow.pop %v1284
        %v1286 = vmul.f32 %v1265, 1.442695
        %v1287 = vpow.pop %v1286
        %v1288 = vmul.f32 %v1266, 1.442695
        %v1289 = vpow.pop %v1288
        %v1290 = vmul.f32 %v1267, 1.442695
        %v1291 = vpow.pop %v1290
        %v1292 = vmul.f32 %v1268, 1.442695
        %v1293 = vpow.pop %v1292
        %v1294 = vmul.f32 %v1269, 1.442695
        %v1295 = vpow.pop %v1294
        %v1296 = vmul.f32 %v1270, 1.442695
        %v1297 = vpow.pop %v1296
        %v1298 = vmul.f32 %v1271, 1.442695
        %v1299 = vpow.pop %v1298
        %v1300 = vmul.f32 %v1272, 1.442695
        %v1301 = vpow.pop %v1300
        %v1302 = vmul.f32 %v1273, 1.442695
        %v1303 = vpow.pop %v1302
        %v1304 = vmul.f32 %v1274, 1.442695
        %v1305 = vpow.pop %v1304
        %v1306 = vmul.f32 %v1275, 1.442695
        %v1307 = vpow.pop %v1306
        %v1308 = vmul.f32 %v1277, %v426
        %v1309 = vmul.f32 %v1279, %v426
        %v1310 = vmul.f32 %v1281, %v426
        %v1311 = vmul.f32 %v1283, %v426
        %v1312 = vmul.f32 %v1285, %v426
        %v1313 = vmul.f32 %v1287, %v426
        %v1314 = vmul.f32 %v1289, %v426
        %v1315 = vmul.f32 %v1291, %v426
        %v1316 = vmul.f32 %v1293, %v426
        %v1317 = vmul.f32 %v1295, %v426
        %v1318 = vmul.f32 %v1297, %v426
        %v1319 = vmul.f32 %v1299, %v426
        %v1320 = vmul.f32 %v1301, %v426
        %v1321 = vmul.f32 %v1303, %v426
        %v1322 = vmul.f32 %v1305, %v426
        %v1323 = vmul.f32 %v1307, %v426
        %1324 = vst [vmem:[%s212 + $0x280] sm:$0xff] %v1308
        %1325 = vst [vmem:[%s212 + $0x288] sm:$0xff] %v1309
        %1326 = vst [vmem:[%s212 + $0x290] sm:$0xff] %v1310
        %1327 = vst [vmem:[%s212 + $0x298] sm:$0xff] %v1311
        %1328 = vst [vmem:[%s212 + $0x2a0] sm:$0xff] %v1312
        %1329 = vst [vmem:[%s212 + $0x2a8] sm:$0xff] %v1313
        %1330 = vst [vmem:[%s212 + $0x2b0] sm:$0xff] %v1314
        %1331 = vst [vmem:[%s212 + $0x2b8] sm:$0xff] %v1315
        %1332 = vst [vmem:[%s212 + $0x2c0] sm:$0xff] %v1316
        %1333 = vst [vmem:[%s212 + $0x2c8] sm:$0xff] %v1317
        %1334 = vst [vmem:[%s212 + $0x2d0] sm:$0xff] %v1318
        %1335 = vst [vmem:[%s212 + $0x2d8] sm:$0xff] %v1319
        %1336 = vst [vmem:[%s212 + $0x2e0] sm:$0xff] %v1320
        %1337 = vst [vmem:[%s212 + $0x2e8] sm:$0xff] %v1321
        %1338 = vst [vmem:[%s212 + $0x2f0] sm:$0xff] %v1322
        %1339 = vst [vmem:[%s212 + $0x2f8] sm:$0xff] %v1323
        %1340 = vset.pattern.permute.xlu0 6
        %1341 = vperm.xlu0 %1340, %v234
        %v1342 = vpop.permute.xlu0 %1341
        %1344 = vset.pattern.permute.xlu0 6
        %1345 = vperm.xlu0 %1344, %v235
        %v1346 = vpop.permute.xlu0 %1345
        %1348 = vset.pattern.permute.xlu0 6
        %1349 = vperm.xlu0 %1348, %v236
        %v1350 = vpop.permute.xlu0 %1349
        %1352 = vset.pattern.permute.xlu0 6
        %1353 = vperm.xlu0 %1352, %v237
        %v1354 = vpop.permute.xlu0 %1353
        %1356 = vset.pattern.permute.xlu0 6
        %1357 = vperm.xlu0 %1356, %v238
        %v1358 = vpop.permute.xlu0 %1357
        %1360 = vset.pattern.permute.xlu0 6
        %1361 = vperm.xlu0 %1360, %v239
        %v1362 = vpop.permute.xlu0 %1361
        %1364 = vset.pattern.permute.xlu0 6
        %1365 = vperm.xlu0 %1364, %v240
        %v1366 = vpop.permute.xlu0 %1365
        %1368 = vset.pattern.permute.xlu0 6
        %1369 = vperm.xlu0 %1368, %v241
        %v1370 = vpop.permute.xlu0 %1369
        %1372 = vset.pattern.permute.xlu0 6
        %1373 = vperm.xlu0 %1372, %v242
        %v1374 = vpop.permute.xlu0 %1373
        %1376 = vset.pattern.permute.xlu0 6
        %1377 = vperm.xlu0 %1376, %v243
        %v1378 = vpop.permute.xlu0 %1377
        %1380 = vset.pattern.permute.xlu0 6
        %1381 = vperm.xlu0 %1380, %v244
        %v1382 = vpop.permute.xlu0 %1381
        %1384 = vset.pattern.permute.xlu0 6
        %1385 = vperm.xlu0 %1384, %v245
        %v1386 = vpop.permute.xlu0 %1385
        %1388 = vset.pattern.permute.xlu0 6
        %1389 = vperm.xlu0 %1388, %v246
        %v1390 = vpop.permute.xlu0 %1389
        %1392 = vset.pattern.permute.xlu0 6
        %1393 = vperm.xlu0 %1392, %v247
        %v1394 = vpop.permute.xlu0 %1393
        %1396 = vset.pattern.permute.xlu0 6
        %1397 = vperm.xlu0 %1396, %v248
        %v1398 = vpop.permute.xlu0 %1397
        %1400 = vset.pattern.permute.xlu0 6
        %1401 = vperm.xlu0 %1400, %v249
        %v1402 = vpop.permute.xlu0 %1401
        %v1404 = vsub.f32 %v1342, %v334
        %v1405 = vsub.f32 %v1346, %v334
        %v1406 = vsub.f32 %v1350, %v334
        %v1407 = vsub.f32 %v1354, %v334
        %v1408 = vsub.f32 %v1358, %v334
        %v1409 = vsub.f32 %v1362, %v334
        %v1410 = vsub.f32 %v1366, %v334
        %v1411 = vsub.f32 %v1370, %v334
        %v1412 = vsub.f32 %v1374, %v334
        %v1413 = vsub.f32 %v1378, %v334
        %v1414 = vsub.f32 %v1382, %v334
        %v1415 = vsub.f32 %v1386, %v334
        %v1416 = vsub.f32 %v1390, %v334
        %v1417 = vsub.f32 %v1394, %v334
        %v1418 = vsub.f32 %v1398, %v334
        %v1419 = vsub.f32 %v1402, %v334
        %v1420 = vmul.f32 %v1404, %v1404
        %v1421 = vmul.f32 %v1405, %v1405
        %v1422 = vmul.f32 %v1406, %v1406
        %v1423 = vmul.f32 %v1407, %v1407
        %v1424 = vmul.f32 %v1408, %v1408
        %v1425 = vmul.f32 %v1409, %v1409
        %v1426 = vmul.f32 %v1410, %v1410
        %v1427 = vmul.f32 %v1411, %v1411
        %v1428 = vmul.f32 %v1412, %v1412
        %v1429 = vmul.f32 %v1413, %v1413
        %v1430 = vmul.f32 %v1414, %v1414
        %v1431 = vmul.f32 %v1415, %v1415
        %v1432 = vmul.f32 %v1416, %v1416
        %v1433 = vmul.f32 %v1417, %v1417
        %v1434 = vmul.f32 %v1418, %v1418
        %v1435 = vmul.f32 %v1419, %v1419
        %v1436 = vmul.f32 %v1420, %v372
        %v1437 = vmul.f32 %v1421, %v372
        %v1438 = vmul.f32 %v1422, %v372
        %v1439 = vmul.f32 %v1423, %v372
        %v1440 = vmul.f32 %v1424, %v372
        %v1441 = vmul.f32 %v1425, %v372
        %v1442 = vmul.f32 %v1426, %v372
        %v1443 = vmul.f32 %v1427, %v372
        %v1444 = vmul.f32 %v1428, %v372
        %v1445 = vmul.f32 %v1429, %v372
        %v1446 = vmul.f32 %v1430, %v372
        %v1447 = vmul.f32 %v1431, %v372
        %v1448 = vmul.f32 %v1432, %v372
        %v1449 = vmul.f32 %v1433, %v372
        %v1450 = vmul.f32 %v1434, %v372
        %v1451 = vmul.f32 %v1435, %v372
        %v1452 = vmul.f32 %v1436, 1.442695
        %v1453 = vpow.pop %v1452
        %v1454 = vmul.f32 %v1437, 1.442695
        %v1455 = vpow.pop %v1454
        %v1456 = vmul.f32 %v1438, 1.442695
        %v1457 = vpow.pop %v1456
        %v1458 = vmul.f32 %v1439, 1.442695
        %v1459 = vpow.pop %v1458
        %v1460 = vmul.f32 %v1440, 1.442695
        %v1461 = vpow.pop %v1460
        %v1462 = vmul.f32 %v1441, 1.442695
        %v1463 = vpow.pop %v1462
        %v1464 = vmul.f32 %v1442, 1.442695
        %v1465 = vpow.pop %v1464
        %v1466 = vmul.f32 %v1443, 1.442695
        %v1467 = vpow.pop %v1466
        %v1468 = vmul.f32 %v1444, 1.442695
        %v1469 = vpow.pop %v1468
        %v1470 = vmul.f32 %v1445, 1.442695
        %v1471 = vpow.pop %v1470
        %v1472 = vmul.f32 %v1446, 1.442695
        %v1473 = vpow.pop %v1472
        %v1474 = vmul.f32 %v1447, 1.442695
        %v1475 = vpow.pop %v1474
        %v1476 = vmul.f32 %v1448, 1.442695
        %v1477 = vpow.pop %v1476
        %v1478 = vmul.f32 %v1449, 1.442695
        %v1479 = vpow.pop %v1478
        %v1480 = vmul.f32 %v1450, 1.442695
        %v1481 = vpow.pop %v1480
        %v1482 = vmul.f32 %v1451, 1.442695
        %v1483 = vpow.pop %v1482
        %v1484 = vmul.f32 %v1453, %v426
        %v1485 = vmul.f32 %v1455, %v426
        %v1486 = vmul.f32 %v1457, %v426
        %v1487 = vmul.f32 %v1459, %v426
        %v1488 = vmul.f32 %v1461, %v426
        %v1489 = vmul.f32 %v1463, %v426
        %v1490 = vmul.f32 %v1465, %v426
        %v1491 = vmul.f32 %v1467, %v426
        %v1492 = vmul.f32 %v1469, %v426
        %v1493 = vmul.f32 %v1471, %v426
        %v1494 = vmul.f32 %v1473, %v426
        %v1495 = vmul.f32 %v1475, %v426
        %v1496 = vmul.f32 %v1477, %v426
        %v1497 = vmul.f32 %v1479, %v426
        %v1498 = vmul.f32 %v1481, %v426
        %v1499 = vmul.f32 %v1483, %v426
        %1500 = vst [vmem:[%s212 + $0x300] sm:$0xff] %v1484
        %1501 = vst [vmem:[%s212 + $0x308] sm:$0xff] %v1485
        %1502 = vst [vmem:[%s212 + $0x310] sm:$0xff] %v1486
        %1503 = vst [vmem:[%s212 + $0x318] sm:$0xff] %v1487
        %1504 = vst [vmem:[%s212 + $0x320] sm:$0xff] %v1488
        %1505 = vst [vmem:[%s212 + $0x328] sm:$0xff] %v1489
        %1506 = vst [vmem:[%s212 + $0x330] sm:$0xff] %v1490
        %1507 = vst [vmem:[%s212 + $0x338] sm:$0xff] %v1491
        %1508 = vst [vmem:[%s212 + $0x340] sm:$0xff] %v1492
        %1509 = vst [vmem:[%s212 + $0x348] sm:$0xff] %v1493
        %1510 = vst [vmem:[%s212 + $0x350] sm:$0xff] %v1494
        %1511 = vst [vmem:[%s212 + $0x358] sm:$0xff] %v1495
        %1512 = vst [vmem:[%s212 + $0x360] sm:$0xff] %v1496
        %1513 = vst [vmem:[%s212 + $0x368] sm:$0xff] %v1497
        %1514 = vst [vmem:[%s212 + $0x370] sm:$0xff] %v1498
        %1515 = vst [vmem:[%s212 + $0x378] sm:$0xff] %v1499
        %1516 = vset.pattern.permute.xlu0 7
        %1517 = vperm.xlu0 %1516, %v234
        %v1518 = vpop.permute.xlu0 %1517
        %1520 = vset.pattern.permute.xlu0 7
        %1521 = vperm.xlu0 %1520, %v235
        %v1522 = vpop.permute.xlu0 %1521
        %1524 = vset.pattern.permute.xlu0 7
        %1525 = vperm.xlu0 %1524, %v236
        %v1526 = vpop.permute.xlu0 %1525
        %1528 = vset.pattern.permute.xlu0 7
        %1529 = vperm.xlu0 %1528, %v237
        %v1530 = vpop.permute.xlu0 %1529
        %1532 = vset.pattern.permute.xlu0 7
        %1533 = vperm.xlu0 %1532, %v238
        %v1534 = vpop.permute.xlu0 %1533
        %1536 = vset.pattern.permute.xlu0 7
        %1537 = vperm.xlu0 %1536, %v239
        %v1538 = vpop.permute.xlu0 %1537
        %1540 = vset.pattern.permute.xlu0 7
        %1541 = vperm.xlu0 %1540, %v240
        %v1542 = vpop.permute.xlu0 %1541
        %1544 = vset.pattern.permute.xlu0 7
        %1545 = vperm.xlu0 %1544, %v241
        %v1546 = vpop.permute.xlu0 %1545
        %1548 = vset.pattern.permute.xlu0 7
        %1549 = vperm.xlu0 %1548, %v242
        %v1550 = vpop.permute.xlu0 %1549
        %1552 = vset.pattern.permute.xlu0 7
        %1553 = vperm.xlu0 %1552, %v243
        %v1554 = vpop.permute.xlu0 %1553
        %1556 = vset.pattern.permute.xlu0 7
        %1557 = vperm.xlu0 %1556, %v244
        %v1558 = vpop.permute.xlu0 %1557
        %1560 = vset.pattern.permute.xlu0 7
        %1561 = vperm.xlu0 %1560, %v245
        %v1562 = vpop.permute.xlu0 %1561
        %1564 = vset.pattern.permute.xlu0 7
        %1565 = vperm.xlu0 %1564, %v246
        %v1566 = vpop.permute.xlu0 %1565
        %1568 = vset.pattern.permute.xlu0 7
        %1569 = vperm.xlu0 %1568, %v247
        %v1570 = vpop.permute.xlu0 %1569
        %1572 = vset.pattern.permute.xlu0 7
        %1573 = vperm.xlu0 %1572, %v248
        %v1574 = vpop.permute.xlu0 %1573
        %1576 = vset.pattern.permute.xlu0 7
        %1577 = vperm.xlu0 %1576, %v249
        %v1578 = vpop.permute.xlu0 %1577
        %v1580 = vsub.f32 %v1518, %v334
        %v1581 = vsub.f32 %v1522, %v334
        %v1582 = vsub.f32 %v1526, %v334
        %v1583 = vsub.f32 %v1530, %v334
        %v1584 = vsub.f32 %v1534, %v334
        %v1585 = vsub.f32 %v1538, %v334
        %v1586 = vsub.f32 %v1542, %v334
        %v1587 = vsub.f32 %v1546, %v334
        %v1588 = vsub.f32 %v1550, %v334
        %v1589 = vsub.f32 %v1554, %v334
        %v1590 = vsub.f32 %v1558, %v334
        %v1591 = vsub.f32 %v1562, %v334
        %v1592 = vsub.f32 %v1566, %v334
        %v1593 = vsub.f32 %v1570, %v334
        %v1594 = vsub.f32 %v1574, %v334
        %v1595 = vsub.f32 %v1578, %v334
        %v1596 = vmul.f32 %v1580, %v1580
        %v1597 = vmul.f32 %v1581, %v1581
        %v1598 = vmul.f32 %v1582, %v1582
        %v1599 = vmul.f32 %v1583, %v1583
        %v1600 = vmul.f32 %v1584, %v1584
        %v1601 = vmul.f32 %v1585, %v1585
        %v1602 = vmul.f32 %v1586, %v1586
        %v1603 = vmul.f32 %v1587, %v1587
        %v1604 = vmul.f32 %v1588, %v1588
        %v1605 = vmul.f32 %v1589, %v1589
        %v1606 = vmul.f32 %v1590, %v1590
        %v1607 = vmul.f32 %v1591, %v1591
        %v1608 = vmul.f32 %v1592, %v1592
        %v1609 = vmul.f32 %v1593, %v1593
        %v1610 = vmul.f32 %v1594, %v1594
        %v1611 = vmul.f32 %v1595, %v1595
        %v1612 = vmul.f32 %v1596, %v372
        %v1613 = vmul.f32 %v1597, %v372
        %v1614 = vmul.f32 %v1598, %v372
        %v1615 = vmul.f32 %v1599, %v372
        %v1616 = vmul.f32 %v1600, %v372
        %v1617 = vmul.f32 %v1601, %v372
        %v1618 = vmul.f32 %v1602, %v372
        %v1619 = vmul.f32 %v1603, %v372
        %v1620 = vmul.f32 %v1604, %v372
        %v1621 = vmul.f32 %v1605, %v372
        %v1622 = vmul.f32 %v1606, %v372
        %v1623 = vmul.f32 %v1607, %v372
        %v1624 = vmul.f32 %v1608, %v372
        %v1625 = vmul.f32 %v1609, %v372
        %v1626 = vmul.f32 %v1610, %v372
        %v1627 = vmul.f32 %v1611, %v372
        %v1628 = vmul.f32 %v1612, 1.442695
        %v1629 = vpow.pop %v1628
        %v1630 = vmul.f32 %v1613, 1.442695
        %v1631 = vpow.pop %v1630
        %v1632 = vmul.f32 %v1614, 1.442695
        %v1633 = vpow.pop %v1632
        %v1634 = vmul.f32 %v1615, 1.442695
        %v1635 = vpow.pop %v1634
        %v1636 = vmul.f32 %v1616, 1.442695
        %v1637 = vpow.pop %v1636
        %v1638 = vmul.f32 %v1617, 1.442695
        %v1639 = vpow.pop %v1638
        %v1640 = vmul.f32 %v1618, 1.442695
        %v1641 = vpow.pop %v1640
        %v1642 = vmul.f32 %v1619, 1.442695
        %v1643 = vpow.pop %v1642
        %v1644 = vmul.f32 %v1620, 1.442695
        %v1645 = vpow.pop %v1644
        %v1646 = vmul.f32 %v1621, 1.442695
        %v1647 = vpow.pop %v1646
        %v1648 = vmul.f32 %v1622, 1.442695
        %v1649 = vpow.pop %v1648
        %v1650 = vmul.f32 %v1623, 1.442695
        %v1651 = vpow.pop %v1650
        %v1652 = vmul.f32 %v1624, 1.442695
        %v1653 = vpow.pop %v1652
        %v1654 = vmul.f32 %v1625, 1.442695
        %v1655 = vpow.pop %v1654
        %v1656 = vmul.f32 %v1626, 1.442695
        %v1657 = vpow.pop %v1656
        %v1658 = vmul.f32 %v1627, 1.442695
        %v1659 = vpow.pop %v1658
        %v1660 = vmul.f32 %v1629, %v426
        %v1661 = vmul.f32 %v1631, %v426
        %v1662 = vmul.f32 %v1633, %v426
        %v1663 = vmul.f32 %v1635, %v426
        %v1664 = vmul.f32 %v1637, %v426
        %v1665 = vmul.f32 %v1639, %v426
        %v1666 = vmul.f32 %v1641, %v426
        %v1667 = vmul.f32 %v1643, %v426
        %v1668 = vmul.f32 %v1645, %v426
        %v1669 = vmul.f32 %v1647, %v426
        %v1670 = vmul.f32 %v1649, %v426
        %v1671 = vmul.f32 %v1651, %v426
        %v1672 = vmul.f32 %v1653, %v426
        %v1673 = vmul.f32 %v1655, %v426
        %v1674 = vmul.f32 %v1657, %v426
        %v1675 = vmul.f32 %v1659, %v426
        %1676 = vst [vmem:[%s212 + $0x380] sm:$0xff] %v1660
        %1677 = vst [vmem:[%s212 + $0x388] sm:$0xff] %v1661
        %1678 = vst [vmem:[%s212 + $0x390] sm:$0xff] %v1662
        %1679 = vst [vmem:[%s212 + $0x398] sm:$0xff] %v1663
        %1680 = vst [vmem:[%s212 + $0x3a0] sm:$0xff] %v1664
        %1681 = vst [vmem:[%s212 + $0x3a8] sm:$0xff] %v1665
        %1682 = vst [vmem:[%s212 + $0x3b0] sm:$0xff] %v1666
        %1683 = vst [vmem:[%s212 + $0x3b8] sm:$0xff] %v1667
        %1684 = vst [vmem:[%s212 + $0x3c0] sm:$0xff] %v1668
        %1685 = vst [vmem:[%s212 + $0x3c8] sm:$0xff] %v1669
        %1686 = vst [vmem:[%s212 + $0x3d0] sm:$0xff] %v1670
        %1687 = vst [vmem:[%s212 + $0x3d8] sm:$0xff] %v1671
        %1688 = vst [vmem:[%s212 + $0x3e0] sm:$0xff] %v1672
        %1689 = vst [vmem:[%s212 + $0x3e8] sm:$0xff] %v1673
        %1690 = vst [vmem:[%s212 + $0x3f0] sm:$0xff] %v1674
        %1691 = vst [vmem:[%s212 + $0x3f8] sm:$0xff] %v1675
        %s1692 = sand.u32 %s118, 1
        %s1693 = scalar_lea.sflag [#allocation4], %s1692
        %s1694 = sand.u32 %s118, 1
        %s1695 = smul.addr %s1694, 1024
        %s1696 = scalar_lea.vmem [#allocation5], %s1695
        // Predicated region
        $region41: #{tpu_custom_call.1} parent=35 // pred_check
          %p1697 = pneg %p128
        $region42: #{tpu_custom_call.1} parent=35 // pred_check_branch
          %1699 = sbr.rel (%p1697) target = $region44
        $region43: #{tpu_custom_call.1} parent=35 // pred_region
          %s1700 = smul.u32 128, %s21
          %s1702 = ssub.s32 16384, 16384
          %1703 = vsyncadd %s1693, %s1702
          %s1704 = smul.addr %s1700, 128
          %s1705 = scalar_lea.hbm %s4, %s1704
          %s1706 = sshll.u32 %s1696, 4
          %s1707 = int_to_ptr.vmem [resolvable:$true] %s1706
          %1712 = dma.vmem_to_hbm [thread:$0]  %s1707, 16384, %s1705, %s1693, 128, 128, 8
        $region44: #{tpu_custom_call.1} parent=35 // pred_fallthru
          _
      $region36: #{tpu_custom_call.1} parent=5 // pred_fallthru
        _
      %p1713 = scmp.le.s32.totalorder 2, %s16
      // Predicated region
      $region45: #{tpu_custom_call.1} parent=5 // pred_check
        %p1714 = pneg %p1713
      $region46: #{tpu_custom_call.1} parent=5 // pred_check_branch
        %1716 = sbr.rel (%p1714) target = $region48
      $region47: #{tpu_custom_call.1} parent=5 // pred_region
        %s1717 = ssub.s32 %s16, 2
        // Predicated region
        $region49: #{tpu_custom_call.1} parent=47 // pred_check
          %p1718 = pneg %p134
        $region50: #{tpu_custom_call.1} parent=47 // pred_check_branch
          %1720 = sbr.rel (%p1718) target = $region52
        $region51: #{tpu_custom_call.1} parent=47 // pred_region
          %s1721 = sand.u32 %s119, 1
          %s1722 = scalar_lea.sflag [#allocation4], %s1721
          %s1723 = sand.u32 %s119, 1
          %s1724 = smul.addr %s1723, 1024
          %s1725 = scalar_lea.vmem [#allocation5], %s1724
          %1726 = dma.done %s1722, 16384
        $region52: #{tpu_custom_call.1} parent=47 // pred_fallthru
          _
      $region48: #{tpu_custom_call.1} parent=5 // pred_fallthru
        _
    $region6: #{tpu_custom_call.1} parent=1 // loop_footer
      %s20 = sadd.s32 1, %s16
    $region7: #{tpu_custom_call.1} parent=1 // loop_footer_branch
      %15 = sbr.rel target = $region3
    $region8: #{tpu_custom_call.1} parent=1 // loop_exit
      _
    %1727 = vsyncpa [#allocation3], 1
    %s1728 = scalar_lea.sflag [#allocation3], 1
    %1729 = vsyncpa %s1728, 1
    %1730 = vsyncpa [#allocation4], 1
    %s1731 = scalar_lea.sflag [#allocation4], 1
    %1732 = vsyncpa %s1731, 1

</llo_original>
